<compile_context>
chip_gen: v6e
topology: v6e:2x2x1
jax: 0.10.0
libtpu: 0.0.40
codegen_flags: <defaults>
</compile_context>

<pallas_src>
import jax
import jax.numpy as jnp
from jax.experimental import pallas as pl
from jax.experimental.pallas import tpu as pltpu


_K = 5                    # conv kernel size
_C1, _C2 = 10, 20         # conv1 / conv2 output channels
_PH1, _PH2 = 384, 128     # 128-aligned per-pooling-phase column-slab widths
_FC_IN, _FC_OUT = 50, 10  # Flatten(50) -> Linear(50, 10)


def _vmem_spec():
    return pl.BlockSpec(memory_space=pltpu.MemorySpace.VMEM)


# ------------------------------ fused kernel ------------------------------

def _lenet_kernel(x_ref, t1_ref, b1e_ref, t2_ref, b2p_ref, wf_ref, bf_ref,
                  out_ref, flat_ref):
    ph1 = b1e_ref.shape[1]
    ph2 = b2p_ref.shape[1]
    n_batch = x_ref.shape[0]

    # conv1 as Toeplitz matmul; columns grouped by 2x2 pooling phase so
    # max_pool2d is a max over 4 contiguous, 128-aligned lane slabs.
    z1 = jnp.dot(x_ref[...], t1_ref[...], preferred_element_type=jnp.float32)
    h1 = jnp.maximum(jnp.maximum(z1[:, 0 * ph1:1 * ph1], z1[:, 1 * ph1:2 * ph1]),
                     jnp.maximum(z1[:, 2 * ph1:3 * ph1], z1[:, 3 * ph1:4 * ph1]))
    h1 = jnp.maximum(h1 + b1e_ref[...], 0.0)          # relu(maxpool(conv1)+b1)

    # conv2 (same trick; conv2 output is 2x2, so the 4 slabs ARE the pool window)
    z2 = jnp.dot(h1.astype(t2_ref.dtype), t2_ref[...],
                 preferred_element_type=jnp.float32)
    p2 = jnp.maximum(jnp.maximum(z2[:, 0 * ph2:1 * ph2], z2[:, 1 * ph2:2 * ph2]),
                     jnp.maximum(z2[:, 2 * ph2:3 * ph2], z2[:, 3 * ph2:4 * ph2]))
    p2 = jnp.maximum(p2 + b2p_ref[...], 0.0)          # (N, ph2); cols >= 20 are 0

    # Flatten(50) == view(-1, 50): copy each sample's 20 features into the
    # right (row, col) span of a tiny VMEM scratch (static sub-row stores).
    fw = flat_ref.shape[1]                            # 50
    for n in range(n_batch):
        start = n * _C2
        r0, off = start // fw, start % fw
        l0 = min(_C2, fw - off)
        flat_ref[r0:r0 + 1, off:off + l0] = p2[n:n + 1, 0:l0]
        if l0 < _C2:
            flat_ref[r0 + 1:r0 + 2, 0:_C2 - l0] = p2[n:n + 1, l0:_C2]

    # relu -> dropout(identity) -> fc2 -> log_softmax(dim=1)
    z = jnp.dot(flat_ref[...], wf_ref[...],
                preferred_element_type=jnp.float32) + bf_ref[...]
    m = jnp.max(z, axis=-1, keepdims=True)
    lse = jnp.log(jnp.sum(jnp.exp(z - m), axis=-1, keepdims=True))
    out_ref[...] = z - m - lse


# ----------------------- host-side weight preparation -----------------------

def prepare_params(params, height=16, width=16):
    """Expand LeNet weights into the fused kernel's matmul operands (done once)."""
    f32 = jnp.float32
    oh1, ow1 = height - _K + 1, width - _K + 1        # conv1 output (12, 12)
    p1h, p1w = oh1 // 2, ow1 // 2                     # after pool   (6, 6)
    oh2, ow2 = p1h - _K + 1, p1w - _K + 1             # conv2 output (2, 2)
    assert oh1 % 2 == 0 and ow1 % 2 == 0
    assert (oh2, ow2) == (2, 2), "fused pooling layout assumes a 2x2 conv2 output"
    n1 = _C1 * p1h * p1w                              # 360
    assert n1 <= _PH1 and _C2 <= _PH2

    dd = jnp.arange(_K)
    aa = jnp.arange(2)

    def phase_onehot(size_in, size_out):
        # A[d, i, a, p] = 1.0 iff i == 2*p + a + d
        ii = jnp.arange(size_in)
        pp = jnp.arange(size_out)
        return (ii[None, :, None, None] ==
                (2 * pp[None, None, None, :] + aa[None, None, :, None]
                 + dd[:, None, None, None])).astype(f32)

    def out_onehot(size_in, size_out):
        # B[d, s, o] = 1.0 iff s == o + d
        ss = jnp.arange(size_in)
        oo = jnp.arange(size_out)
        return (ss[None, :, None] ==
                (oo[None, None, :] + dd[:, None, None])).astype(f32)

    # conv1 Toeplitz: rows = (i, j) input pixel; cols = (phase a, b | c, pi, pj).
    ai = phase_onehot(height, p1h)
    aj = phase_onehot(width, p1w)
    w1 = params["w1"][:, 0].astype(f32)               # (10, 5, 5)
    t1 = jnp.einsum('cde,diap,ejbq->ijabcpq', w1, ai, aj)
    t1 = t1.reshape(height * width, 4, n1)
    t1 = jnp.pad(t1, ((0, 0), (0, 0), (0, _PH1 - n1)))
    t1 = t1.reshape(height * width, 4 * _PH1).astype(jnp.bfloat16)

    # conv2 Toeplitz: rows = (ci, si, sj) of pooled conv1; cols = (oi, oj | co).
    bi = out_onehot(p1h, oh2)
    bj = out_onehot(p1w, ow2)
    w2 = params["w2"].astype(f32)                     # (20, 10, 5, 5)
    t2 = jnp.einsum('kcde,dso,etu->cstouk', w2, bi, bj)
    t2 = t2.reshape(n1, 4, _C2)
    t2 = jnp.pad(t2, ((0, _PH1 - n1), (0, 0), (0, _PH2 - _C2)))
    t2 = t2.reshape(_PH1, 4 * _PH2).astype(jnp.bfloat16)

    b1e = jnp.pad(jnp.repeat(params["b1"].astype(f32), p1h * p1w),
                  (0, _PH1 - n1))[None, :]            # (1, _PH1)
    b2p = jnp.pad(params["b2"].astype(f32), (0, _PH2 - _C2))[None, :]  # (1, _PH2)

    return {
        "t1": t1, "b1e": b1e, "t2": t2, "b2p": b2p,
        "wf": params["wf"].T.astype(f32),             # (50, 10)
        "bf": params["bf"].astype(f32)[None, :],      # (1, 10)
    }


# ------------------------------- forward pass -------------------------------

def lenet_forward(prep, x):
    n, _, h, w = x.shape
    feat = n * _C2                                    # (N, 20, 1, 1) after pool2
    assert feat % _FC_IN == 0, "Flatten(50): N*20 must be divisible by 50"
    rows = feat // _FC_IN
    x2d = x.reshape(n, h * w).astype(jnp.bfloat16)
    return pl.pallas_call(
        _lenet_kernel,
        out_shape=jax.ShapeDtypeStruct((rows, _FC_OUT), jnp.float32),
        in_specs=[_vmem_spec()] * 7,
        out_specs=_vmem_spec(),
        scratch_shapes=[pltpu.VMEM((rows, _FC_IN), jnp.float32)],
    )(x2d, prep["t1"], prep["b1e"], prep["t2"], prep["b2p"],
      prep["wf"], prep["bf"])


# ------------------------------ params / check ------------------------------

def init_params(key):
    """Deterministic PyTorch-style uniform(-1/sqrt(fan_in), 1/sqrt(fan_in))."""
    ks = jax.random.split(key, 6)

    def u(k, shape, fan_in):
        bound = 1.0 / jnp.sqrt(jnp.float32(fan_in))
        return jax.random.uniform(k, shape, jnp.float32, -bound, bound)

    return {
        "w1": u(ks[0], (10, 1, 5, 5), 1 * 5 * 5),
        "b1": u(ks[1], (10,), 1 * 5 * 5),
        "w2": u(ks[2], (20, 10, 5, 5), 10 * 5 * 5),
        "b2": u(ks[3], (20,), 10 * 5 * 5),
        "wf": u(ks[4], (10, 50), 50),   # nn.Linear(50, 10) weight: (out, in)
        "bf": u(ks[5], (10,), 50),
    }


def _reference_forward(params, x):
    dn = ("NCHW", "OIHW", "NCHW")
    y = jax.lax.conv_general_dilated(x, params["w1"], (1, 1), "VALID",
                                     dimension_numbers=dn)
    y = y + params["b1"][None, :, None, None]
    y = jax.lax.reduce_window(y, -jnp.inf, jax.lax.max,
                              (1, 1, 2, 2), (1, 1, 2, 2), "VALID")
    y = jnp.maximum(y, 0.0)
    y = jax.lax.conv_general_dilated(y, params["w2"], (1, 1), "VALID",
                                     dimension_numbers=dn)
    y = y + params["b2"][None, :, None, None]
    y = jax.lax.reduce_window(y, -jnp.inf, jax.lax.max,
                              (1, 1, 2, 2), (1, 1, 2, 2), "VALID")
    y = jnp.maximum(y, 0.0)
    y = y.reshape(-1, _FC_IN)
    y = jnp.maximum(y, 0.0)
    z = y @ params["wf"].T + params["bf"]
    return jax.nn.log_softmax(z, axis=-1)


if __name__ == "__main__":
    key = jax.random.PRNGKey(0)
    pkey, xkey = jax.random.split(key)
    params = init_params(pkey)
    prep = prepare_params(params, height=16, width=16)

    # batch=5, channels=1, spatial=16x16:
    #   conv1 -> (5,10,12,12), pool -> (5,10,6,6),
    #   conv2 -> (5,20,2,2),  pool -> (5,20,1,1),
    #   flatten (view(-1, 50)) -> (2,50), fc2 -> (2,10)
    x = jax.random.normal(xkey, (5, 1, 16, 16), dtype=jnp.float32)

    out = jax.block_until_ready(lenet_forward(prep, x))
    assert out.shape == (2, 10)
    # log_softmax rows must (approximately) exponentiate-sum to 1
    assert jnp.allclose(jnp.sum(jnp.exp(out), axis=-1), 1.0, atol=1e-4)
    # match the plain-JAX reference (bf16 matmul inputs -> loose tolerance)
    ref = _reference_forward(params, x)
    assert jnp.allclose(out, ref, atol=5e-2), (out, ref)
    print("KERNEL_OK")
</pallas_src>

<mosaic_0001>
module attributes {stable_mosaic.version = 11 : i64} {
  func.func @_lenet_kernel(%arg0: memref<5x256xbf16, #tpu.memory_space<vmem>>, %arg1: memref<256x1536xbf16, #tpu.memory_space<vmem>>, %arg2: memref<1x384xf32, #tpu.memory_space<vmem>>, %arg3: memref<384x512xbf16, #tpu.memory_space<vmem>>, %arg4: memref<1x128xf32, #tpu.memory_space<vmem>>, %arg5: memref<50x10xf32, #tpu.memory_space<vmem>>, %arg6: memref<1x10xf32, #tpu.memory_space<vmem>>, %arg7: memref<2x10xf32, #tpu.memory_space<vmem>>, %arg8: memref<2x50xf32, #tpu.memory_space<vmem>>) attributes {dimension_semantics = [], scalar_prefetch = 0 : i64, scratch_operands = 1 : i64, tpu.core_type = #tpu.core_type<tc>} {
    %c0 = arith.constant 0 : index
    %c0_0 = arith.constant 0 : index
    %0 = vector.load %arg0[%c0, %c0_0] : memref<5x256xbf16, #tpu.memory_space<vmem>>, vector<5x256xbf16>
    %c0_1 = arith.constant 0 : index
    %c0_2 = arith.constant 0 : index
    %1 = vector.load %arg1[%c0_1, %c0_2] : memref<256x1536xbf16, #tpu.memory_space<vmem>>, vector<256x1536xbf16>
    %cst = arith.constant dense<0.000000e+00> : vector<5x1536xf32>
    %2 = tpu.matmul %0, %1, %cst {dimension_numbers = #tpu.dot_dimension_numbers<[1], [0], [0], [1], [0, 0, 1, 1], [], []>} : vector<5x256xbf16>, vector<256x1536xbf16>, vector<5x1536xf32> -> vector<5x1536xf32>
    %3 = vector.extract_strided_slice %2 {offsets = [0, 0], sizes = [5, 384], strides = [1, 1]} : vector<5x1536xf32> to vector<5x384xf32>
    %4 = vector.extract_strided_slice %2 {offsets = [0, 384], sizes = [5, 384], strides = [1, 1]} : vector<5x1536xf32> to vector<5x384xf32>
    %5 = arith.maximumf %3, %4 : vector<5x384xf32>
    %6 = vector.extract_strided_slice %2 {offsets = [0, 768], sizes = [5, 384], strides = [1, 1]} : vector<5x1536xf32> to vector<5x384xf32>
    %7 = vector.extract_strided_slice %2 {offsets = [0, 1152], sizes = [5, 384], strides = [1, 1]} : vector<5x1536xf32> to vector<5x384xf32>
    %8 = arith.maximumf %6, %7 : vector<5x384xf32>
    %9 = arith.maximumf %5, %8 : vector<5x384xf32>
    %c0_3 = arith.constant 0 : index
    %c0_4 = arith.constant 0 : index
    %10 = vector.load %arg2[%c0_3, %c0_4] : memref<1x384xf32, #tpu.memory_space<vmem>>, vector<1x384xf32>
    %11 = vector.broadcast %10 : vector<1x384xf32> to vector<5x384xf32>
    %12 = arith.addf %9, %11 : vector<5x384xf32>
    %cst_5 = arith.constant 0.000000e+00 : f32
    %13 = vector.broadcast %cst_5 : f32 to vector<5x384xf32>
    %14 = arith.maximumf %12, %13 : vector<5x384xf32>
    %15 = arith.truncf %14 : vector<5x384xf32> to vector<5x384xbf16>
    %c0_6 = arith.constant 0 : index
    %c0_7 = arith.constant 0 : index
    %16 = vector.load %arg3[%c0_6, %c0_7] : memref<384x512xbf16, #tpu.memory_space<vmem>>, vector<384x512xbf16>
    %cst_8 = arith.constant dense<0.000000e+00> : vector<5x512xf32>
    %17 = tpu.matmul %15, %16, %cst_8 {dimension_numbers = #tpu.dot_dimension_numbers<[1], [0], [0], [1], [0, 0, 1, 1], [], []>} : vector<5x384xbf16>, vector<384x512xbf16>, vector<5x512xf32> -> vector<5x512xf32>
    %18 = vector.extract_strided_slice %17 {offsets = [0, 0], sizes = [5, 128], strides = [1, 1]} : vector<5x512xf32> to vector<5x128xf32>
    %19 = vector.extract_strided_slice %17 {offsets = [0, 128], sizes = [5, 128], strides = [1, 1]} : vector<5x512xf32> to vector<5x128xf32>
    %20 = arith.maximumf %18, %19 : vector<5x128xf32>
    %21 = vector.extract_strided_slice %17 {offsets = [0, 256], sizes = [5, 128], strides = [1, 1]} : vector<5x512xf32> to vector<5x128xf32>
    %22 = vector.extract_strided_slice %17 {offsets = [0, 384], sizes = [5, 128], strides = [1, 1]} : vector<5x512xf32> to vector<5x128xf32>
    %23 = arith.maximumf %21, %22 : vector<5x128xf32>
    %24 = arith.maximumf %20, %23 : vector<5x128xf32>
    %c0_9 = arith.constant 0 : index
    %c0_10 = arith.constant 0 : index
    %25 = vector.load %arg4[%c0_9, %c0_10] : memref<1x128xf32, #tpu.memory_space<vmem>>, vector<1x128xf32>
    %26 = vector.broadcast %25 : vector<1x128xf32> to vector<5x128xf32>
    %27 = arith.addf %24, %26 : vector<5x128xf32>
    %cst_11 = arith.constant 0.000000e+00 : f32
    %28 = vector.broadcast %cst_11 : f32 to vector<5x128xf32>
    %29 = arith.maximumf %27, %28 : vector<5x128xf32>
    %30 = vector.extract_strided_slice %29 {offsets = [0, 0], sizes = [1, 20], strides = [1, 1]} : vector<5x128xf32> to vector<1x20xf32>
    %c0_12 = arith.constant 0 : index
    %c0_13 = arith.constant 0 : index
    %31 = vector.load %arg8[%c0_12, %c0_13] : memref<2x50xf32, #tpu.memory_space<vmem>>, vector<1x20xf32>
    tpu.vector_store %arg8[%c0_12, %c0_13], %30 {strides = array<i32>} : memref<2x50xf32, #tpu.memory_space<vmem>>, vector<1x20xf32>,
    %32 = vector.extract_strided_slice %29 {offsets = [1, 0], sizes = [1, 20], strides = [1, 1]} : vector<5x128xf32> to vector<1x20xf32>
    %c0_14 = arith.constant 0 : index
    %c20 = arith.constant 20 : index
    %33 = vector.load %arg8[%c0_14, %c20] : memref<2x50xf32, #tpu.memory_space<vmem>>, vector<1x20xf32>
    tpu.vector_store %arg8[%c0_14, %c20], %32 {strides = array<i32>} : memref<2x50xf32, #tpu.memory_space<vmem>>, vector<1x20xf32>,
    %34 = vector.extract_strided_slice %29 {offsets = [2, 0], sizes = [1, 10], strides = [1, 1]} : vector<5x128xf32> to vector<1x10xf32>
    %c0_15 = arith.constant 0 : index
    %c40 = arith.constant 40 : index
    %35 = vector.load %arg8[%c0_15, %c40] : memref<2x50xf32, #tpu.memory_space<vmem>>, vector<1x10xf32>
    tpu.vector_store %arg8[%c0_15, %c40], %34 {strides = array<i32>} : memref<2x50xf32, #tpu.memory_space<vmem>>, vector<1x10xf32>,
    %36 = vector.extract_strided_slice %29 {offsets = [2, 10], sizes = [1, 10], strides = [1, 1]} : vector<5x128xf32> to vector<1x10xf32>
    %c1 = arith.constant 1 : index
    %c0_16 = arith.constant 0 : index
    %37 = vector.load %arg8[%c1, %c0_16] : memref<2x50xf32, #tpu.memory_space<vmem>>, vector<1x10xf32>
    tpu.vector_store %arg8[%c1, %c0_16], %36 {strides = array<i32>} : memref<2x50xf32, #tpu.memory_space<vmem>>, vector<1x10xf32>,
    %38 = vector.extract_strided_slice %29 {offsets = [3, 0], sizes = [1, 20], strides = [1, 1]} : vector<5x128xf32> to vector<1x20xf32>
    %c1_17 = arith.constant 1 : index
    %c10 = arith.constant 10 : index
    %39 = vector.load %arg8[%c1_17, %c10] : memref<2x50xf32, #tpu.memory_space<vmem>>, vector<1x20xf32>
    tpu.vector_store %arg8[%c1_17, %c10], %38 {strides = array<i32>} : memref<2x50xf32, #tpu.memory_space<vmem>>, vector<1x20xf32>,
    %40 = vector.extract_strided_slice %29 {offsets = [4, 0], sizes = [1, 20], strides = [1, 1]} : vector<5x128xf32> to vector<1x20xf32>
    %c1_18 = arith.constant 1 : index
    %c30 = arith.constant 30 : index
    %41 = vector.load %arg8[%c1_18, %c30] : memref<2x50xf32, #tpu.memory_space<vmem>>, vector<1x20xf32>
    tpu.vector_store %arg8[%c1_18, %c30], %40 {strides = array<i32>} : memref<2x50xf32, #tpu.memory_space<vmem>>, vector<1x20xf32>,
    %c0_19 = arith.constant 0 : index
    %c0_20 = arith.constant 0 : index
    %42 = vector.load %arg8[%c0_19, %c0_20] : memref<2x50xf32, #tpu.memory_space<vmem>>, vector<2x50xf32>
    %c0_21 = arith.constant 0 : index
    %c0_22 = arith.constant 0 : index
    %43 = vector.load %arg5[%c0_21, %c0_22] : memref<50x10xf32, #tpu.memory_space<vmem>>, vector<50x10xf32>
    %cst_23 = arith.constant dense<0.000000e+00> : vector<2x10xf32>
    %44 = tpu.matmul %42, %43, %cst_23 {dimension_numbers = #tpu.dot_dimension_numbers<[1], [0], [0], [1], [0, 0, 1, 1], [], []>} : vector<2x50xf32>, vector<50x10xf32>, vector<2x10xf32> -> vector<2x10xf32>
    %c0_24 = arith.constant 0 : index
    %c0_25 = arith.constant 0 : index
    %45 = vector.load %arg6[%c0_24, %c0_25] : memref<1x10xf32, #tpu.memory_space<vmem>>, vector<1x10xf32>
    %46 = vector.broadcast %45 : vector<1x10xf32> to vector<2x10xf32>
    %47 = arith.addf %44, %46 : vector<2x10xf32>
    %cst_26 = arith.constant dense<0xFF800000> : vector<2xf32>
    %48 = vector.multi_reduction <maximumf>, %47, %cst_26 [1] : vector<2x10xf32> to vector<2xf32>
    %49 = vector.shape_cast %48 : vector<2xf32> to vector<2x1xf32>
    %50 = vector.broadcast %49 : vector<2x1xf32> to vector<2x10xf32>
    %51 = arith.subf %47, %50 : vector<2x10xf32>
    %52 = math.exp %51 : vector<2x10xf32>
    %cst_27 = arith.constant dense<0.000000e+00> : vector<2xf32>
    %53 = vector.multi_reduction <add>, %52, %cst_27 [1] : vector<2x10xf32> to vector<2xf32>
    %54 = vector.shape_cast %53 : vector<2xf32> to vector<2x1xf32>
    %55 = math.log %54 : vector<2x1xf32>
    %56 = vector.broadcast %49 : vector<2x1xf32> to vector<2x10xf32>
    %57 = arith.subf %47, %56 : vector<2x10xf32>
    %58 = vector.broadcast %55 : vector<2x1xf32> to vector<2x10xf32>
    %59 = arith.subf %57, %58 : vector<2x10xf32>
    %c0_28 = arith.constant 0 : index
    %c0_29 = arith.constant 0 : index
    %60 = vector.load %arg7[%c0_28, %c0_29] : memref<2x10xf32, #tpu.memory_space<vmem>>, vector<2x10xf32>
    tpu.vector_store %arg7[%c0_28, %c0_29], %59 {strides = array<i32>} : memref<2x10xf32, #tpu.memory_space<vmem>>, vector<2x10xf32>,
    return
  }
}

</mosaic_0001>

<llo_original>
// kernel: tpu_custom_call.1
$region0: #{tpu_custom_call.1}
  #allocation0 [shape = 'u32[]', space=smem, size = 0x4, offset = 0x4, fixed_abs, tag = 'smem constant byte address 0x4 - core index']
  #allocation1 [shape = 'u32[144,128]{1,0:T(1,128)}', space=vmem, size = 0x12000, scoped, tag = 'internal scratch']
  #allocation2 [shape = 'f32[2,50]{1,0:T(2,128)}', space=vmem, size = 0x400, scoped, tag = 'scratch operand']
  %s0 = inlined_call_operand.vmem [shape: bf16[5,256], index: 0, kind: input, shape index: {}]
  %s1 = inlined_call_operand.hbm [shape: bf16[256,1536], index: 1, kind: input, shape index: {}]
  %s2 = inlined_call_operand.vmem [shape: f32[1,384], index: 2, kind: input, shape index: {}]
  %s3 = inlined_call_operand.hbm [shape: bf16[384,512], index: 3, kind: input, shape index: {}]
  %s4 = inlined_call_operand.vmem [shape: f32[1,128], index: 4, kind: input, shape index: {}]
  %s5 = inlined_call_operand.vmem [shape: f32[50,10], index: 5, kind: input, shape index: {}]
  %s6 = inlined_call_operand.vmem [shape: f32[1,10], index: 6, kind: input, shape index: {}]
  %s7 = inlined_call_operand.hbm [shape: f32[2,10], index: 7, kind: output, shape index: {}]
  %s8 = sld [smem:[#allocation0]]
  $region46: #{tpu_custom_call.1} parent=0
    _
  %s10 = ssub.s32 1, %s8
  %s11 = scalar_select 0, %s10, %s8
  $region1: #{tpu_custom_call.1} parent=0
    #allocation3 [shape = 'u8[786432]{0}', space=vmem, size = 0xc0000, scoped, tag = 'input window, operand 1, single buffered']
    #allocation4 [shape = 's32[1]{0}', space=sflag, size = 0x4, scoped, tag = 'scoped memory for tpu_custom_call.1']
    #allocation5 [shape = 's32[1]{0}', space=sflag, size = 0x4, scoped, tag = 'scoped memory for tpu_custom_call.1']
    #allocation6 [shape = 'u8[393216]{0}', space=vmem, size = 0x60000, scoped, tag = 'input window, operand 3, single buffered']
    #allocation7 [shape = 's32[1]{0}', space=sflag, size = 0x4, scoped, tag = 'scoped memory for tpu_custom_call.1']
    #allocation8 [shape = 'u8[1024]{0}', space=vmem, size = 0x400, scoped, tag = 'output window, operand 0, single buffered']
    %12 = vsyncpa [#allocation4], 0
    %13 = vsyncpa [#allocation7], 0
    %14 = vsyncpa [#allocation5], 0
    // Predicated region
    $region2: #{tpu_custom_call.1} parent=1 // pred_check
      _
    $region3: #{tpu_custom_call.1} parent=1 // pred_check_branch
      %16 = sbr.rel (0) target = $region5
    $region4: #{tpu_custom_call.1} parent=1 // pred_region
      _
    $region5: #{tpu_custom_call.1} parent=1 // pred_fallthru
      _
    // Predicated region
    $region6: #{tpu_custom_call.1} parent=1 // pred_check
      _
    $region7: #{tpu_custom_call.1} parent=1 // pred_check_branch
      %18 = sbr.rel (0) target = $region9
    $region8: #{tpu_custom_call.1} parent=1 // pred_region
      %s20 = ssub.s32 24576, 24576
      %21 = vsyncadd [#allocation4], %s20
      %s22 = sshll.u32 [#allocation3], 4
      %s23 = int_to_ptr.vmem [resolvable:$true] %s22
      %28 = dma.hbm_to_vmem [thread:$0]  %s1, 24576, %s23, [#allocation4], 768, 768, 48
    $region9: #{tpu_custom_call.1} parent=1 // pred_fallthru
      _
    // Predicated region
    $region10: #{tpu_custom_call.1} parent=1 // pred_check
      _
    $region11: #{tpu_custom_call.1} parent=1 // pred_check_branch
      %30 = sbr.rel (0) target = $region13
    $region12: #{tpu_custom_call.1} parent=1 // pred_region
      _
    $region13: #{tpu_custom_call.1} parent=1 // pred_fallthru
      _
    // Predicated region
    $region14: #{tpu_custom_call.1} parent=1 // pred_check
      _
    $region15: #{tpu_custom_call.1} parent=1 // pred_check_branch
      %32 = sbr.rel (0) target = $region17
    $region16: #{tpu_custom_call.1} parent=1 // pred_region
      %s34 = ssub.s32 12288, 12288
      %35 = vsyncadd [#allocation7], %s34
      %s36 = sshll.u32 [#allocation6], 4
      %s37 = int_to_ptr.vmem [resolvable:$true] %s36
      %42 = dma.hbm_to_vmem [thread:$0]  %s3, 12288, %s37, [#allocation7], 256, 256, 16
    $region17: #{tpu_custom_call.1} parent=1 // pred_fallthru
      _
    // Predicated region
    $region18: #{tpu_custom_call.1} parent=1 // pred_check
      _
    $region19: #{tpu_custom_call.1} parent=1 // pred_check_branch
      %44 = sbr.rel (0) target = $region21
    $region20: #{tpu_custom_call.1} parent=1 // pred_region
      _
    $region21: #{tpu_custom_call.1} parent=1 // pred_fallthru
      _
    // Predicated region
    $region22: #{tpu_custom_call.1} parent=1 // pred_check
      _
    $region23: #{tpu_custom_call.1} parent=1 // pred_check_branch
      %46 = sbr.rel (0) target = $region25
    $region24: #{tpu_custom_call.1} parent=1 // pred_region
      _
    $region25: #{tpu_custom_call.1} parent=1 // pred_fallthru
      _
    // Predicated region
    $region26: #{tpu_custom_call.1} parent=1 // pred_check
      _
    $region27: #{tpu_custom_call.1} parent=1 // pred_check_branch
      %48 = sbr.rel (0) target = $region29
    $region28: #{tpu_custom_call.1} parent=1 // pred_region
      _
    $region29: #{tpu_custom_call.1} parent=1 // pred_fallthru
      _
    // Predicated region
    $region30: #{tpu_custom_call.1} parent=1 // pred_check
      _
    $region31: #{tpu_custom_call.1} parent=1 // pred_check_branch
      %50 = sbr.rel (0) target = $region33
    $region32: #{tpu_custom_call.1} parent=1 // pred_region
      %51 = dma.done [#allocation4], 24576
    $region33: #{tpu_custom_call.1} parent=1 // pred_fallthru
      _
    // Predicated region
    $region34: #{tpu_custom_call.1} parent=1 // pred_check
      _
    $region35: #{tpu_custom_call.1} parent=1 // pred_check_branch
      %53 = sbr.rel (0) target = $region37
    $region36: #{tpu_custom_call.1} parent=1 // pred_region
      %54 = dma.done [#allocation7], 12288
    $region37: #{tpu_custom_call.1} parent=1 // pred_fallthru
      _
    %v56 = vld [vmem:[%s0] sm:$0x77]
    %v57 = vld [vmem:[#allocation3] sm:$0xff]
    %v58 = vld [vmem:[#allocation3 + $0x8] sm:$0xff]
    %v59 = vld [vmem:[#allocation3 + $0x10] sm:$0xff]
    %v60 = vld [vmem:[#allocation3 + $0x18] sm:$0xff]
    %v61 = vld [vmem:[#allocation3 + $0x20] sm:$0xff]
    %v62 = vld [vmem:[#allocation3 + $0x28] sm:$0xff]
    %v63 = vld [vmem:[#allocation3 + $0x30] sm:$0xff]
    %v64 = vld [vmem:[#allocation3 + $0x38] sm:$0xff]
    %v65 = vld [vmem:[#allocation3 + $0x40] sm:$0xff]
    %v66 = vld [vmem:[#allocation3 + $0x48] sm:$0xff]
    %v67 = vld [vmem:[#allocation3 + $0x50] sm:$0xff]
    %v68 = vld [vmem:[#allocation3 + $0x58] sm:$0xff]
    %v69 = vld [vmem:[#allocation3 + $0x60] sm:$0xff]
    %v70 = vld [vmem:[#allocation3 + $0x68] sm:$0xff]
    %v71 = vld [vmem:[#allocation3 + $0x70] sm:$0xff]
    %v72 = vld [vmem:[#allocation3 + $0x78] sm:$0xff]
    %v73 = vld [vmem:[#allocation3 + $0x80] sm:$0xff]
    %v74 = vld [vmem:[#allocation3 + $0x88] sm:$0xff]
    %v75 = vld [vmem:[#allocation3 + $0x90] sm:$0xff]
    %v76 = vld [vmem:[#allocation3 + $0x98] sm:$0xff]
    %v77 = vld [vmem:[#allocation3 + $0xa0] sm:$0xff]
    %v78 = vld [vmem:[#allocation3 + $0xa8] sm:$0xff]
    %v79 = vld [vmem:[#allocation3 + $0xb0] sm:$0xff]
    %v80 = vld [vmem:[#allocation3 + $0xb8] sm:$0xff]
    %v81 = vld [vmem:[#allocation3 + $0xc0] sm:$0xff]
    %v82 = vld [vmem:[#allocation3 + $0xc8] sm:$0xff]
    %v83 = vld [vmem:[#allocation3 + $0xd0] sm:$0xff]
    %v84 = vld [vmem:[#allocation3 + $0xd8] sm:$0xff]
    %v85 = vld [vmem:[#allocation3 + $0xe0] sm:$0xff]
    %v86 = vld [vmem:[#allocation3 + $0xe8] sm:$0xff]
    %v87 = vld [vmem:[#allocation3 + $0xf0] sm:$0xff]
    %v88 = vld [vmem:[#allocation3 + $0xf8] sm:$0xff]
    %v89 = vld [vmem:[#allocation3 + $0x100] sm:$0xff]
    %v90 = vld [vmem:[#allocation3 + $0x108] sm:$0xff]
    %v91 = vld [vmem:[#allocation3 + $0x110] sm:$0xff]
    %v92 = vld [vmem:[#allocation3 + $0x118] sm:$0xff]
    %v93 = vld [vmem:[#allocation3 + $0x120] sm:$0xff]
    %v94 = vld [vmem:[#allocation3 + $0x128] sm:$0xff]
    %v95 = vld [vmem:[#allocation3 + $0x130] sm:$0xff]
    %v96 = vld [vmem:[#allocation3 + $0x138] sm:$0xff]
    %v97 = vld [vmem:[#allocation3 + $0x140] sm:$0xff]
    %v98 = vld [vmem:[#allocation3 + $0x148] sm:$0xff]
    %v99 = vld [vmem:[#allocation3 + $0x150] sm:$0xff]
    %v100 = vld [vmem:[#allocation3 + $0x158] sm:$0xff]
    %v101 = vld [vmem:[#allocation3 + $0x160] sm:$0xff]
    %v102 = vld [vmem:[#allocation3 + $0x168] sm:$0xff]
    %v103 = vld [vmem:[#allocation3 + $0x170] sm:$0xff]
    %v104 = vld [vmem:[#allocation3 + $0x178] sm:$0xff]
    %v105 = vld [vmem:[#allocation3 + $0x180] sm:$0xff]
    %v106 = vld [vmem:[#allocation3 + $0x188] sm:$0xff]
    %v107 = vld [vmem:[#allocation3 + $0x190] sm:$0xff]
    %v108 = vld [vmem:[#allocation3 + $0x198] sm:$0xff]
    %v109 = vld [vmem:[#allocation3 + $0x1a0] sm:$0xff]
    %v110 = vld [vmem:[#allocation3 + $0x1a8] sm:$0xff]
    %v111 = vld [vmem:[#allocation3 + $0x1b0] sm:$0xff]
    %v112 = vld [vmem:[#allocation3 + $0x1b8] sm:$0xff]
    %v113 = vld [vmem:[#allocation3 + $0x1c0] sm:$0xff]
    %v114 = vld [vmem:[#allocation3 + $0x1c8] sm:$0xff]
    %v115 = vld [vmem:[#allocation3 + $0x1d0] sm:$0xff]
    %v116 = vld [vmem:[#allocation3 + $0x1d8] sm:$0xff]
    %v117 = vld [vmem:[#allocation3 + $0x1e0] sm:$0xff]
    %v118 = vld [vmem:[#allocation3 + $0x1e8] sm:$0xff]
    %v119 = vld [vmem:[#allocation3 + $0x1f0] sm:$0xff]
    %v120 = vld [vmem:[#allocation3 + $0x1f8] sm:$0xff]
    %v121 = vld [vmem:[#allocation3 + $0x200] sm:$0xff]
    %v122 = vld [vmem:[#allocation3 + $0x208] sm:$0xff]
    %v123 = vld [vmem:[#allocation3 + $0x210] sm:$0xff]
    %v124 = vld [vmem:[#allocation3 + $0x218] sm:$0xff]
    %v125 = vld [vmem:[#allocation3 + $0x220] sm:$0xff]
    %v126 = vld [vmem:[#allocation3 + $0x228] sm:$0xff]
    %v127 = vld [vmem:[#allocation3 + $0x230] sm:$0xff]
    %v128 = vld [vmem:[#allocation3 + $0x238] sm:$0xff]
    %v129 = vld [vmem:[#allocation3 + $0x240] sm:$0xff]
    %v130 = vld [vmem:[#allocation3 + $0x248] sm:$0xff]
    %v131 = vld [vmem:[#allocation3 + $0x250] sm:$0xff]
    %v132 = vld [vmem:[#allocation3 + $0x258] sm:$0xff]
    %v133 = vld [vmem:[#allocation3 + $0x260] sm:$0xff]
    %v134 = vld [vmem:[#allocation3 + $0x268] sm:$0xff]
    %v135 = vld [vmem:[#allocation3 + $0x270] sm:$0xff]
    %v136 = vld [vmem:[#allocation3 + $0x278] sm:$0xff]
    %v137 = vld [vmem:[#allocation3 + $0x280] sm:$0xff]
    %v138 = vld [vmem:[#allocation3 + $0x288] sm:$0xff]
    %v139 = vld [vmem:[#allocation3 + $0x290] sm:$0xff]
    %v140 = vld [vmem:[#allocation3 + $0x298] sm:$0xff]
    %v141 = vld [vmem:[#allocation3 + $0x2a0] sm:$0xff]
    %v142 = vld [vmem:[#allocation3 + $0x2a8] sm:$0xff]
    %v143 = vld [vmem:[#allocation3 + $0x2b0] sm:$0xff]
    %v144 = vld [vmem:[#allocation3 + $0x2b8] sm:$0xff]
    %v145 = vld [vmem:[#allocation3 + $0x2c0] sm:$0xff]
    %v146 = vld [vmem:[#allocation3 + $0x2c8] sm:$0xff]
    %v147 = vld [vmem:[#allocation3 + $0x2d0] sm:$0xff]
    %v148 = vld [vmem:[#allocation3 + $0x2d8] sm:$0xff]
    %v149 = vld [vmem:[#allocation3 + $0x2e0] sm:$0xff]
    %v150 = vld [vmem:[#allocation3 + $0x2e8] sm:$0xff]
    %v151 = vld [vmem:[#allocation3 + $0x2f0] sm:$0xff]
    %v152 = vld [vmem:[#allocation3 + $0x2f8] sm:$0xff]
    %v153 = vld [vmem:[#allocation3 + $0x300] sm:$0xff]
    %v154 = vld [vmem:[#allocation3 + $0x308] sm:$0xff]
    %v155 = vld [vmem:[#allocation3 + $0x310] sm:$0xff]
    %v156 = vld [vmem:[#allocation3 + $0x318] sm:$0xff]
    %v157 = vld [vmem:[#allocation3 + $0x320] sm:$0xff]
    %v158 = vld [vmem:[#allocation3 + $0x328] sm:$0xff]
    %v159 = vld [vmem:[#allocation3 + $0x330] sm:$0xff]
    %v160 = vld [vmem:[#allocation3 + $0x338] sm:$0xff]
    %v161 = vld [vmem:[#allocation3 + $0x340] sm:$0xff]
    %v162 = vld [vmem:[#allocation3 + $0x348] sm:$0xff]
    %v163 = vld [vmem:[#allocation3 + $0x350] sm:$0xff]
    %v164 = vld [vmem:[#allocation3 + $0x358] sm:$0xff]
    %v165 = vld [vmem:[#allocation3 + $0x360] sm:$0xff]
    %v166 = vld [vmem:[#allocation3 + $0x368] sm:$0xff]
    %v167 = vld [vmem:[#allocation3 + $0x370] sm:$0xff]
    %v168 = vld [vmem:[#allocation3 + $0x378] sm:$0xff]
    %v169 = vld [vmem:[#allocation3 + $0x380] sm:$0xff]
    %v170 = vld [vmem:[#allocation3 + $0x388] sm:$0xff]
    %v171 = vld [vmem:[#allocation3 + $0x390] sm:$0xff]
    %v172 = vld [vmem:[#allocation3 + $0x398] sm:$0xff]
    %v173 = vld [vmem:[#allocation3 + $0x3a0] sm:$0xff]
    %v174 = vld [vmem:[#allocation3 + $0x3a8] sm:$0xff]
    %v175 = vld [vmem:[#allocation3 + $0x3b0] sm:$0xff]
    %v176 = vld [vmem:[#allocation3 + $0x3b8] sm:$0xff]
    %v177 = vld [vmem:[#allocation3 + $0x3c0] sm:$0xff]
    %v178 = vld [vmem:[#allocation3 + $0x3c8] sm:$0xff]
    %v179 = vld [vmem:[#allocation3 + $0x3d0] sm:$0xff]
    %v180 = vld [vmem:[#allocation3 + $0x3d8] sm:$0xff]
    %v181 = vld [vmem:[#allocation3 + $0x3e0] sm:$0xff]
    %v182 = vld [vmem:[#allocation3 + $0x3e8] sm:$0xff]
    %v183 = vld [vmem:[#allocation3 + $0x3f0] sm:$0xff]
    %v184 = vld [vmem:[#allocation3 + $0x3f8] sm:$0xff]
    %v185 = vld [vmem:[#allocation3 + $0x400] sm:$0xff]
    %v186 = vld [vmem:[#allocation3 + $0x408] sm:$0xff]
    %v187 = vld [vmem:[#allocation3 + $0x410] sm:$0xff]
    %v188 = vld [vmem:[#allocation3 + $0x418] sm:$0xff]
    %v189 = vld [vmem:[#allocation3 + $0x420] sm:$0xff]
    %v190 = vld [vmem:[#allocation3 + $0x428] sm:$0xff]
    %v191 = vld [vmem:[#allocation3 + $0x430] sm:$0xff]
    %v192 = vld [vmem:[#allocation3 + $0x438] sm:$0xff]
    %v193 = vld [vmem:[#allocation3 + $0x440] sm:$0xff]
    %v194 = vld [vmem:[#allocation3 + $0x448] sm:$0xff]
    %v195 = vld [vmem:[#allocation3 + $0x450] sm:$0xff]
    %v196 = vld [vmem:[#allocation3 + $0x458] sm:$0xff]
    %v197 = vld [vmem:[#allocation3 + $0x460] sm:$0xff]
    %v198 = vld [vmem:[#allocation3 + $0x468] sm:$0xff]
    %v199 = vld [vmem:[#allocation3 + $0x470] sm:$0xff]
    %v200 = vld [vmem:[#allocation3 + $0x478] sm:$0xff]
    %v201 = vld [vmem:[#allocation3 + $0x480] sm:$0xff]
    %v202 = vld [vmem:[#allocation3 + $0x488] sm:$0xff]
    %v203 = vld [vmem:[#allocation3 + $0x490] sm:$0xff]
    %v204 = vld [vmem:[#allocation3 + $0x498] sm:$0xff]
    %v205 = vld [vmem:[#allocation3 + $0x4a0] sm:$0xff]
    %v206 = vld [vmem:[#allocation3 + $0x4a8] sm:$0xff]
    %v207 = vld [vmem:[#allocation3 + $0x4b0] sm:$0xff]
    %v208 = vld [vmem:[#allocation3 + $0x4b8] sm:$0xff]
    %v209 = vld [vmem:[#allocation3 + $0x4c0] sm:$0xff]
    %v210 = vld [vmem:[#allocation3 + $0x4c8] sm:$0xff]
    %v211 = vld [vmem:[#allocation3 + $0x4d0] sm:$0xff]
    %v212 = vld [vmem:[#allocation3 + $0x4d8] sm:$0xff]
    %v213 = vld [vmem:[#allocation3 + $0x4e0] sm:$0xff]
    %v214 = vld [vmem:[#allocation3 + $0x4e8] sm:$0xff]
    %v215 = vld [vmem:[#allocation3 + $0x4f0] sm:$0xff]
    %v216 = vld [vmem:[#allocation3 + $0x4f8] sm:$0xff]
    %v217 = vld [vmem:[#allocation3 + $0x500] sm:$0xff]
    %v218 = vld [vmem:[#allocation3 + $0x508] sm:$0xff]
    %v219 = vld [vmem:[#allocation3 + $0x510] sm:$0xff]
    %v220 = vld [vmem:[#allocation3 + $0x518] sm:$0xff]
    %v221 = vld [vmem:[#allocation3 + $0x520] sm:$0xff]
    %v222 = vld [vmem:[#allocation3 + $0x528] sm:$0xff]
    %v223 = vld [vmem:[#allocation3 + $0x530] sm:$0xff]
    %v224 = vld [vmem:[#allocation3 + $0x538] sm:$0xff]
    %v225 = vld [vmem:[#allocation3 + $0x540] sm:$0xff]
    %v226 = vld [vmem:[#allocation3 + $0x548] sm:$0xff]
    %v227 = vld [vmem:[#allocation3 + $0x550] sm:$0xff]
    %v228 = vld [vmem:[#allocation3 + $0x558] sm:$0xff]
    %v229 = vld [vmem:[#allocation3 + $0x560] sm:$0xff]
    %v230 = vld [vmem:[#allocation3 + $0x568] sm:$0xff]
    %v231 = vld [vmem:[#allocation3 + $0x570] sm:$0xff]
    %v232 = vld [vmem:[#allocation3 + $0x578] sm:$0xff]
    %v233 = vld [vmem:[#allocation3 + $0x580] sm:$0xff]
    %v234 = vld [vmem:[#allocation3 + $0x588] sm:$0xff]
    %v235 = vld [vmem:[#allocation3 + $0x590] sm:$0xff]
    %v236 = vld [vmem:[#allocation3 + $0x598] sm:$0xff]
    %v237 = vld [vmem:[#allocation3 + $0x5a0] sm:$0xff]
    %v238 = vld [vmem:[#allocation3 + $0x5a8] sm:$0xff]
    %v239 = vld [vmem:[#allocation3 + $0x5b0] sm:$0xff]
    %v240 = vld [vmem:[#allocation3 + $0x5b8] sm:$0xff]
    %v241 = vld [vmem:[#allocation3 + $0x5c0] sm:$0xff]
    %v242 = vld [vmem:[#allocation3 + $0x5c8] sm:$0xff]
    %v243 = vld [vmem:[#allocation3 + $0x5d0] sm:$0xff]
    %v244 = vld [vmem:[#allocation3 + $0x5d8] sm:$0xff]
    %v245 = vld [vmem:[#allocation3 + $0x5e0] sm:$0xff]
    %v246 = vld [vmem:[#allocation3 + $0x5e8] sm:$0xff]
    %v247 = vld [vmem:[#allocation3 + $0x5f0] sm:$0xff]
    %v248 = vld [vmem:[#allocation3 + $0x5f8] sm:$0xff]
    %v250 = vunpack.c.l.b16 %v56
    %v251 = vunpack.c.h.b16 %v56
    %v252 = vpack.c.b16 %v250, %v250
    %v253 = vpack.c.b16 %v251, %v251
    %v448 = vunpack.c.l.b16 %v57
    %v449 = vunpack.c.h.b16 %v57
    %v450 = vunpack.c.l.b16 %v58
    %v451 = vunpack.c.h.b16 %v58
    %v452 = vunpack.c.l.b16 %v59
    %v453 = vunpack.c.h.b16 %v59
    %v454 = vunpack.c.l.b16 %v60
    %v455 = vunpack.c.h.b16 %v60
    %v456 = vunpack.c.l.b16 %v61
    %v457 = vunpack.c.h.b16 %v61
    %v458 = vunpack.c.l.b16 %v62
    %v459 = vunpack.c.h.b16 %v62
    %v460 = vunpack.c.l.b16 %v63
    %v461 = vunpack.c.h.b16 %v63
    %v462 = vunpack.c.l.b16 %v64
    %v463 = vunpack.c.h.b16 %v64
    %v464 = vunpack.c.l.b16 %v65
    %v465 = vunpack.c.h.b16 %v65
    %v466 = vunpack.c.l.b16 %v66
    %v467 = vunpack.c.h.b16 %v66
    %v468 = vunpack.c.l.b16 %v67
    %v469 = vunpack.c.h.b16 %v67
    %v470 = vunpack.c.l.b16 %v68
    %v471 = vunpack.c.h.b16 %v68
    %v472 = vunpack.c.l.b16 %v69
    %v473 = vunpack.c.h.b16 %v69
    %v474 = vunpack.c.l.b16 %v70
    %v475 = vunpack.c.h.b16 %v70
    %v476 = vunpack.c.l.b16 %v71
    %v477 = vunpack.c.h.b16 %v71
    %v478 = vunpack.c.l.b16 %v72
    %v479 = vunpack.c.h.b16 %v72
    %v480 = vunpack.c.l.b16 %v73
    %v481 = vunpack.c.h.b16 %v73
    %v482 = vunpack.c.l.b16 %v74
    %v483 = vunpack.c.h.b16 %v74
    %v484 = vunpack.c.l.b16 %v75
    %v485 = vunpack.c.h.b16 %v75
    %v486 = vunpack.c.l.b16 %v76
    %v487 = vunpack.c.h.b16 %v76
    %v488 = vunpack.c.l.b16 %v77
    %v489 = vunpack.c.h.b16 %v77
    %v490 = vunpack.c.l.b16 %v78
    %v491 = vunpack.c.h.b16 %v78
    %v492 = vunpack.c.l.b16 %v79
    %v493 = vunpack.c.h.b16 %v79
    %v494 = vunpack.c.l.b16 %v80
    %v495 = vunpack.c.h.b16 %v80
    %v496 = vunpack.c.l.b16 %v81
    %v497 = vunpack.c.h.b16 %v81
    %v498 = vunpack.c.l.b16 %v82
    %v499 = vunpack.c.h.b16 %v82
    %v500 = vunpack.c.l.b16 %v83
    %v501 = vunpack.c.h.b16 %v83
    %v502 = vunpack.c.l.b16 %v84
    %v503 = vunpack.c.h.b16 %v84
    %v504 = vunpack.c.l.b16 %v85
    %v505 = vunpack.c.h.b16 %v85
    %v506 = vunpack.c.l.b16 %v86
    %v507 = vunpack.c.h.b16 %v86
    %v508 = vunpack.c.l.b16 %v87
    %v509 = vunpack.c.h.b16 %v87
    %v510 = vunpack.c.l.b16 %v88
    %v511 = vunpack.c.h.b16 %v88
    %v512 = vunpack.c.l.b16 %v89
    %v513 = vunpack.c.h.b16 %v89
    %v514 = vunpack.c.l.b16 %v90
    %v515 = vunpack.c.h.b16 %v90
    %v516 = vunpack.c.l.b16 %v91
    %v517 = vunpack.c.h.b16 %v91
    %v518 = vunpack.c.l.b16 %v92
    %v519 = vunpack.c.h.b16 %v92
    %v520 = vunpack.c.l.b16 %v93
    %v521 = vunpack.c.h.b16 %v93
    %v522 = vunpack.c.l.b16 %v94
    %v523 = vunpack.c.h.b16 %v94
    %v524 = vunpack.c.l.b16 %v95
    %v525 = vunpack.c.h.b16 %v95
    %v526 = vunpack.c.l.b16 %v96
    %v527 = vunpack.c.h.b16 %v96
    %v528 = vunpack.c.l.b16 %v97
    %v529 = vunpack.c.h.b16 %v97
    %v530 = vunpack.c.l.b16 %v98
    %v531 = vunpack.c.h.b16 %v98
    %v532 = vunpack.c.l.b16 %v99
    %v533 = vunpack.c.h.b16 %v99
    %v534 = vunpack.c.l.b16 %v100
    %v535 = vunpack.c.h.b16 %v100
    %v536 = vunpack.c.l.b16 %v101
    %v537 = vunpack.c.h.b16 %v101
    %v538 = vunpack.c.l.b16 %v102
    %v539 = vunpack.c.h.b16 %v102
    %v540 = vunpack.c.l.b16 %v103
    %v541 = vunpack.c.h.b16 %v103
    %v542 = vunpack.c.l.b16 %v104
    %v543 = vunpack.c.h.b16 %v104
    %v544 = vunpack.c.l.b16 %v105
    %v545 = vunpack.c.h.b16 %v105
    %v546 = vunpack.c.l.b16 %v106
    %v547 = vunpack.c.h.b16 %v106
    %v548 = vunpack.c.l.b16 %v107
    %v549 = vunpack.c.h.b16 %v107
    %v550 = vunpack.c.l.b16 %v108
    %v551 = vunpack.c.h.b16 %v108
    %v552 = vunpack.c.l.b16 %v109
    %v553 = vunpack.c.h.b16 %v109
    %v554 = vunpack.c.l.b16 %v110
    %v555 = vunpack.c.h.b16 %v110
    %v556 = vunpack.c.l.b16 %v111
    %v557 = vunpack.c.h.b16 %v111
    %v558 = vunpack.c.l.b16 %v112
    %v559 = vunpack.c.h.b16 %v112
    %v560 = vunpack.c.l.b16 %v113
    %v561 = vunpack.c.h.b16 %v113
    %v562 = vunpack.c.l.b16 %v114
    %v563 = vunpack.c.h.b16 %v114
    %v564 = vunpack.c.l.b16 %v115
    %v565 = vunpack.c.h.b16 %v115
    %v566 = vunpack.c.l.b16 %v116
    %v567 = vunpack.c.h.b16 %v116
    %v568 = vunpack.c.l.b16 %v117
    %v569 = vunpack.c.h.b16 %v117
    %v570 = vunpack.c.l.b16 %v118
    %v571 = vunpack.c.h.b16 %v118
    %v572 = vunpack.c.l.b16 %v119
    %v573 = vunpack.c.h.b16 %v119
    %v574 = vunpack.c.l.b16 %v120
    %v575 = vunpack.c.h.b16 %v120
    %v576 = vunpack.c.l.b16 %v121
    %v577 = vunpack.c.h.b16 %v121
    %v578 = vunpack.c.l.b16 %v122
    %v579 = vunpack.c.h.b16 %v122
    %v580 = vunpack.c.l.b16 %v123
    %v581 = vunpack.c.h.b16 %v123
    %v582 = vunpack.c.l.b16 %v124
    %v583 = vunpack.c.h.b16 %v124
    %v584 = vunpack.c.l.b16 %v125
    %v585 = vunpack.c.h.b16 %v125
    %v586 = vunpack.c.l.b16 %v126
    %v587 = vunpack.c.h.b16 %v126
    %v588 = vunpack.c.l.b16 %v127
    %v589 = vunpack.c.h.b16 %v127
    %v590 = vunpack.c.l.b16 %v128
    %v591 = vunpack.c.h.b16 %v128
    %v592 = vunpack.c.l.b16 %v129
    %v593 = vunpack.c.h.b16 %v129
    %v594 = vunpack.c.l.b16 %v130
    %v595 = vunpack.c.h.b16 %v130
    %v596 = vunpack.c.l.b16 %v131
    %v597 = vunpack.c.h.b16 %v131
    %v598 = vunpack.c.l.b16 %v132
    %v599 = vunpack.c.h.b16 %v132
    %v600 = vunpack.c.l.b16 %v133
    %v601 = vunpack.c.h.b16 %v133
    %v602 = vunpack.c.l.b16 %v134
    %v603 = vunpack.c.h.b16 %v134
    %v604 = vunpack.c.l.b16 %v135
    %v605 = vunpack.c.h.b16 %v135
    %v606 = vunpack.c.l.b16 %v136
    %v607 = vunpack.c.h.b16 %v136
    %v608 = vunpack.c.l.b16 %v137
    %v609 = vunpack.c.h.b16 %v137
    %v610 = vunpack.c.l.b16 %v138
    %v611 = vunpack.c.h.b16 %v138
    %v612 = vunpack.c.l.b16 %v139
    %v613 = vunpack.c.h.b16 %v139
    %v614 = vunpack.c.l.b16 %v140
    %v615 = vunpack.c.h.b16 %v140
    %v616 = vunpack.c.l.b16 %v141
    %v617 = vunpack.c.h.b16 %v141
    %v618 = vunpack.c.l.b16 %v142
    %v619 = vunpack.c.h.b16 %v142
    %v620 = vunpack.c.l.b16 %v143
    %v621 = vunpack.c.h.b16 %v143
    %v622 = vunpack.c.l.b16 %v144
    %v623 = vunpack.c.h.b16 %v144
    %v624 = vunpack.c.l.b16 %v145
    %v625 = vunpack.c.h.b16 %v145
    %v626 = vunpack.c.l.b16 %v146
    %v627 = vunpack.c.h.b16 %v146
    %v628 = vunpack.c.l.b16 %v147
    %v629 = vunpack.c.h.b16 %v147
    %v630 = vunpack.c.l.b16 %v148
    %v631 = vunpack.c.h.b16 %v148
    %v632 = vunpack.c.l.b16 %v149
    %v633 = vunpack.c.h.b16 %v149
    %v634 = vunpack.c.l.b16 %v150
    %v635 = vunpack.c.h.b16 %v150
    %v636 = vunpack.c.l.b16 %v151
    %v637 = vunpack.c.h.b16 %v151
    %v638 = vunpack.c.l.b16 %v152
    %v639 = vunpack.c.h.b16 %v152
    %v640 = vunpack.c.l.b16 %v153
    %v641 = vunpack.c.h.b16 %v153
    %v642 = vunpack.c.l.b16 %v154
    %v643 = vunpack.c.h.b16 %v154
    %v644 = vunpack.c.l.b16 %v155
    %v645 = vunpack.c.h.b16 %v155
    %v646 = vunpack.c.l.b16 %v156
    %v647 = vunpack.c.h.b16 %v156
    %v648 = vunpack.c.l.b16 %v157
    %v649 = vunpack.c.h.b16 %v157
    %v650 = vunpack.c.l.b16 %v158
    %v651 = vunpack.c.h.b16 %v158
    %v652 = vunpack.c.l.b16 %v159
    %v653 = vunpack.c.h.b16 %v159
    %v654 = vunpack.c.l.b16 %v160
    %v655 = vunpack.c.h.b16 %v160
    %v656 = vunpack.c.l.b16 %v161
    %v657 = vunpack.c.h.b16 %v161
    %v658 = vunpack.c.l.b16 %v162
    %v659 = vunpack.c.h.b16 %v162
    %v660 = vunpack.c.l.b16 %v163
    %v661 = vunpack.c.h.b16 %v163
    %v662 = vunpack.c.l.b16 %v164
    %v663 = vunpack.c.h.b16 %v164
    %v664 = vunpack.c.l.b16 %v165
    %v665 = vunpack.c.h.b16 %v165
    %v666 = vunpack.c.l.b16 %v166
    %v667 = vunpack.c.h.b16 %v166
    %v668 = vunpack.c.l.b16 %v167
    %v669 = vunpack.c.h.b16 %v167
    %v670 = vunpack.c.l.b16 %v168
    %v671 = vunpack.c.h.b16 %v168
    %v672 = vunpack.c.l.b16 %v169
    %v673 = vunpack.c.h.b16 %v169
    %v674 = vunpack.c.l.b16 %v170
    %v675 = vunpack.c.h.b16 %v170
    %v676 = vunpack.c.l.b16 %v171
    %v677 = vunpack.c.h.b16 %v171
    %v678 = vunpack.c.l.b16 %v172
    %v679 = vunpack.c.h.b16 %v172
    %v680 = vunpack.c.l.b16 %v173
    %v681 = vunpack.c.h.b16 %v173
    %v682 = vunpack.c.l.b16 %v174
    %v683 = vunpack.c.h.b16 %v174
    %v684 = vunpack.c.l.b16 %v175
    %v685 = vunpack.c.h.b16 %v175
    %v686 = vunpack.c.l.b16 %v176
    %v687 = vunpack.c.h.b16 %v176
    %v688 = vunpack.c.l.b16 %v177
    %v689 = vunpack.c.h.b16 %v177
    %v690 = vunpack.c.l.b16 %v178
    %v691 = vunpack.c.h.b16 %v178
    %v692 = vunpack.c.l.b16 %v179
    %v693 = vunpack.c.h.b16 %v179
    %v694 = vunpack.c.l.b16 %v180
    %v695 = vunpack.c.h.b16 %v180
    %v696 = vunpack.c.l.b16 %v181
    %v697 = vunpack.c.h.b16 %v181
    %v698 = vunpack.c.l.b16 %v182
    %v699 = vunpack.c.h.b16 %v182
    %v700 = vunpack.c.l.b16 %v183
    %v701 = vunpack.c.h.b16 %v183
    %v702 = vunpack.c.l.b16 %v184
    %v703 = vunpack.c.h.b16 %v184
    %v704 = vunpack.c.l.b16 %v185
    %v705 = vunpack.c.h.b16 %v185
    %v706 = vunpack.c.l.b16 %v186
    %v707 = vunpack.c.h.b16 %v186
    %v708 = vunpack.c.l.b16 %v187
    %v709 = vunpack.c.h.b16 %v187
    %v710 = vunpack.c.l.b16 %v188
    %v711 = vunpack.c.h.b16 %v188
    %v712 = vunpack.c.l.b16 %v189
    %v713 = vunpack.c.h.b16 %v189
    %v714 = vunpack.c.l.b16 %v190
    %v715 = vunpack.c.h.b16 %v190
    %v716 = vunpack.c.l.b16 %v191
    %v717 = vunpack.c.h.b16 %v191
    %v718 = vunpack.c.l.b16 %v192
    %v719 = vunpack.c.h.b16 %v192
    %v720 = vunpack.c.l.b16 %v193
    %v721 = vunpack.c.h.b16 %v193
    %v722 = vunpack.c.l.b16 %v194
    %v723 = vunpack.c.h.b16 %v194
    %v724 = vunpack.c.l.b16 %v195
    %v725 = vunpack.c.h.b16 %v195
    %v726 = vunpack.c.l.b16 %v196
    %v727 = vunpack.c.h.b16 %v196
    %v728 = vunpack.c.l.b16 %v197
    %v729 = vunpack.c.h.b16 %v197
    %v730 = vunpack.c.l.b16 %v198
    %v731 = vunpack.c.h.b16 %v198
    %v732 = vunpack.c.l.b16 %v199
    %v733 = vunpack.c.h.b16 %v199
    %v734 = vunpack.c.l.b16 %v200
    %v735 = vunpack.c.h.b16 %v200
    %v736 = vunpack.c.l.b16 %v201
    %v737 = vunpack.c.h.b16 %v201
    %v738 = vunpack.c.l.b16 %v202
    %v739 = vunpack.c.h.b16 %v202
    %v740 = vunpack.c.l.b16 %v203
    %v741 = vunpack.c.h.b16 %v203
    %v742 = vunpack.c.l.b16 %v204
    %v743 = vunpack.c.h.b16 %v204
    %v744 = vunpack.c.l.b16 %v205
    %v745 = vunpack.c.h.b16 %v205
    %v746 = vunpack.c.l.b16 %v206
    %v747 = vunpack.c.h.b16 %v206
    %v748 = vunpack.c.l.b16 %v207
    %v749 = vunpack.c.h.b16 %v207
    %v750 = vunpack.c.l.b16 %v208
    %v751 = vunpack.c.h.b16 %v208
    %v752 = vunpack.c.l.b16 %v209
    %v753 = vunpack.c.h.b16 %v209
    %v754 = vunpack.c.l.b16 %v210
    %v755 = vunpack.c.h.b16 %v210
    %v756 = vunpack.c.l.b16 %v211
    %v757 = vunpack.c.h.b16 %v211
    %v758 = vunpack.c.l.b16 %v212
    %v759 = vunpack.c.h.b16 %v212
    %v760 = vunpack.c.l.b16 %v213
    %v761 = vunpack.c.h.b16 %v213
    %v762 = vunpack.c.l.b16 %v214
    %v763 = vunpack.c.h.b16 %v214
    %v764 = vunpack.c.l.b16 %v215
    %v765 = vunpack.c.h.b16 %v215
    %v766 = vunpack.c.l.b16 %v216
    %v767 = vunpack.c.h.b16 %v216
    %v768 = vunpack.c.l.b16 %v217
    %v769 = vunpack.c.h.b16 %v217
    %v770 = vunpack.c.l.b16 %v218
    %v771 = vunpack.c.h.b16 %v218
    %v772 = vunpack.c.l.b16 %v219
    %v773 = vunpack.c.h.b16 %v219
    %v774 = vunpack.c.l.b16 %v220
    %v775 = vunpack.c.h.b16 %v220
    %v776 = vunpack.c.l.b16 %v221
    %v777 = vunpack.c.h.b16 %v221
    %v778 = vunpack.c.l.b16 %v222
    %v779 = vunpack.c.h.b16 %v222
    %v780 = vunpack.c.l.b16 %v223
    %v781 = vunpack.c.h.b16 %v223
    %v782 = vunpack.c.l.b16 %v224
    %v783 = vunpack.c.h.b16 %v224
    %v784 = vunpack.c.l.b16 %v225
    %v785 = vunpack.c.h.b16 %v225
    %v786 = vunpack.c.l.b16 %v226
    %v787 = vunpack.c.h.b16 %v226
    %v788 = vunpack.c.l.b16 %v227
    %v789 = vunpack.c.h.b16 %v227
    %v790 = vunpack.c.l.b16 %v228
    %v791 = vunpack.c.h.b16 %v228
    %v792 = vunpack.c.l.b16 %v229
    %v793 = vunpack.c.h.b16 %v229
    %v794 = vunpack.c.l.b16 %v230
    %v795 = vunpack.c.h.b16 %v230
    %v796 = vunpack.c.l.b16 %v231
    %v797 = vunpack.c.h.b16 %v231
    %v798 = vunpack.c.l.b16 %v232
    %v799 = vunpack.c.h.b16 %v232
    %v800 = vunpack.c.l.b16 %v233
    %v801 = vunpack.c.h.b16 %v233
    %v802 = vunpack.c.l.b16 %v234
    %v803 = vunpack.c.h.b16 %v234
    %v804 = vunpack.c.l.b16 %v235
    %v805 = vunpack.c.h.b16 %v235
    %v806 = vunpack.c.l.b16 %v236
    %v807 = vunpack.c.h.b16 %v236
    %v808 = vunpack.c.l.b16 %v237
    %v809 = vunpack.c.h.b16 %v237
    %v810 = vunpack.c.l.b16 %v238
    %v811 = vunpack.c.h.b16 %v238
    %v812 = vunpack.c.l.b16 %v239
    %v813 = vunpack.c.h.b16 %v239
    %v814 = vunpack.c.l.b16 %v240
    %v815 = vunpack.c.h.b16 %v240
    %v816 = vunpack.c.l.b16 %v241
    %v817 = vunpack.c.h.b16 %v241
    %v818 = vunpack.c.l.b16 %v242
    %v819 = vunpack.c.h.b16 %v242
    %v820 = vunpack.c.l.b16 %v243
    %v821 = vunpack.c.h.b16 %v243
    %v822 = vunpack.c.l.b16 %v244
    %v823 = vunpack.c.h.b16 %v244
    %v824 = vunpack.c.l.b16 %v245
    %v825 = vunpack.c.h.b16 %v245
    %v826 = vunpack.c.l.b16 %v246
    %v827 = vunpack.c.h.b16 %v246
    %v828 = vunpack.c.l.b16 %v247
    %v829 = vunpack.c.h.b16 %v247
    %v830 = vunpack.c.l.b16 %v248
    %v831 = vunpack.c.h.b16 %v248
    %v832 = vpack.c.b16 %v460, %v448
    %v833 = vpack.c.b16 %v461, %v449
    %v834 = vpack.c.b16 %v462, %v450
    %v835 = vpack.c.b16 %v463, %v451
    %v836 = vpack.c.b16 %v464, %v452
    %v837 = vpack.c.b16 %v465, %v453
    %v838 = vpack.c.b16 %v466, %v454
    %v839 = vpack.c.b16 %v467, %v455
    %v840 = vpack.c.b16 %v468, %v456
    %v841 = vpack.c.b16 %v469, %v457
    %v842 = vpack.c.b16 %v470, %v458
    %v843 = vpack.c.b16 %v471, %v459
    %v844 = vpack.c.b16 %v484, %v472
    %v845 = vpack.c.b16 %v485, %v473
    %v846 = vpack.c.b16 %v486, %v474
    %v847 = vpack.c.b16 %v487, %v475
    %v848 = vpack.c.b16 %v488, %v476
    %v849 = vpack.c.b16 %v489, %v477
    %v850 = vpack.c.b16 %v490, %v478
    %v851 = vpack.c.b16 %v491, %v479
    %v852 = vpack.c.b16 %v492, %v480
    %v853 = vpack.c.b16 %v493, %v481
    %v854 = vpack.c.b16 %v494, %v482
    %v855 = vpack.c.b16 %v495, %v483
    %v856 = vpack.c.b16 %v508, %v496
    %v857 = vpack.c.b16 %v509, %v497
    %v858 = vpack.c.b16 %v510, %v498
    %v859 = vpack.c.b16 %v511, %v499
    %v860 = vpack.c.b16 %v512, %v500
    %v861 = vpack.c.b16 %v513, %v501
    %v862 = vpack.c.b16 %v514, %v502
    %v863 = vpack.c.b16 %v515, %v503
    %v864 = vpack.c.b16 %v516, %v504
    %v865 = vpack.c.b16 %v517, %v505
    %v866 = vpack.c.b16 %v518, %v506
    %v867 = vpack.c.b16 %v519, %v507
    %v868 = vpack.c.b16 %v532, %v520
    %v869 = vpack.c.b16 %v533, %v521
    %v870 = vpack.c.b16 %v534, %v522
    %v871 = vpack.c.b16 %v535, %v523
    %v872 = vpack.c.b16 %v536, %v524
    %v873 = vpack.c.b16 %v537, %v525
    %v874 = vpack.c.b16 %v538, %v526
    %v875 = vpack.c.b16 %v539, %v527
    %v876 = vpack.c.b16 %v540, %v528
    %v877 = vpack.c.b16 %v541, %v529
    %v878 = vpack.c.b16 %v542, %v530
    %v879 = vpack.c.b16 %v543, %v531
    %v880 = vpack.c.b16 %v556, %v544
    %v881 = vpack.c.b16 %v557, %v545
    %v882 = vpack.c.b16 %v558, %v546
    %v883 = vpack.c.b16 %v559, %v547
    %v884 = vpack.c.b16 %v560, %v548
    %v885 = vpack.c.b16 %v561, %v549
    %v886 = vpack.c.b16 %v562, %v550
    %v887 = vpack.c.b16 %v563, %v551
    %v888 = vpack.c.b16 %v564, %v552
    %v889 = vpack.c.b16 %v565, %v553
    %v890 = vpack.c.b16 %v566, %v554
    %v891 = vpack.c.b16 %v567, %v555
    %v892 = vpack.c.b16 %v580, %v568
    %v893 = vpack.c.b16 %v581, %v569
    %v894 = vpack.c.b16 %v582, %v570
    %v895 = vpack.c.b16 %v583, %v571
    %v896 = vpack.c.b16 %v584, %v572
    %v897 = vpack.c.b16 %v585, %v573
    %v898 = vpack.c.b16 %v586, %v574
    %v899 = vpack.c.b16 %v587, %v575
    %v900 = vpack.c.b16 %v588, %v576
    %v901 = vpack.c.b16 %v589, %v577
    %v902 = vpack.c.b16 %v590, %v578
    %v903 = vpack.c.b16 %v591, %v579
    %v904 = vpack.c.b16 %v604, %v592
    %v905 = vpack.c.b16 %v605, %v593
    %v906 = vpack.c.b16 %v606, %v594
    %v907 = vpack.c.b16 %v607, %v595
    %v908 = vpack.c.b16 %v608, %v596
    %v909 = vpack.c.b16 %v609, %v597
    %v910 = vpack.c.b16 %v610, %v598
    %v911 = vpack.c.b16 %v611, %v599
    %v912 = vpack.c.b16 %v612, %v600
    %v913 = vpack.c.b16 %v613, %v601
    %v914 = vpack.c.b16 %v614, %v602
    %v915 = vpack.c.b16 %v615, %v603
    %v916 = vpack.c.b16 %v628, %v616
    %v917 = vpack.c.b16 %v629, %v617
    %v918 = vpack.c.b16 %v630, %v618
    %v919 = vpack.c.b16 %v631, %v619
    %v920 = vpack.c.b16 %v632, %v620
    %v921 = vpack.c.b16 %v633, %v621
    %v922 = vpack.c.b16 %v634, %v622
    %v923 = vpack.c.b16 %v635, %v623
    %v924 = vpack.c.b16 %v636, %v624
    %v925 = vpack.c.b16 %v637, %v625
    %v926 = vpack.c.b16 %v638, %v626
    %v927 = vpack.c.b16 %v639, %v627
    %v928 = vpack.c.b16 %v652, %v640
    %v929 = vpack.c.b16 %v653, %v641
    %v930 = vpack.c.b16 %v654, %v642
    %v931 = vpack.c.b16 %v655, %v643
    %v932 = vpack.c.b16 %v656, %v644
    %v933 = vpack.c.b16 %v657, %v645
    %v934 = vpack.c.b16 %v658, %v646
    %v935 = vpack.c.b16 %v659, %v647
    %v936 = vpack.c.b16 %v660, %v648
    %v937 = vpack.c.b16 %v661, %v649
    %v938 = vpack.c.b16 %v662, %v650
    %v939 = vpack.c.b16 %v663, %v651
    %v940 = vpack.c.b16 %v676, %v664
    %v941 = vpack.c.b16 %v677, %v665
    %v942 = vpack.c.b16 %v678, %v666
    %v943 = vpack.c.b16 %v679, %v667
    %v944 = vpack.c.b16 %v680, %v668
    %v945 = vpack.c.b16 %v681, %v669
    %v946 = vpack.c.b16 %v682, %v670
    %v947 = vpack.c.b16 %v683, %v671
    %v948 = vpack.c.b16 %v684, %v672
    %v949 = vpack.c.b16 %v685, %v673
    %v950 = vpack.c.b16 %v686, %v674
    %v951 = vpack.c.b16 %v687, %v675
    %v952 = vpack.c.b16 %v700, %v688
    %v953 = vpack.c.b16 %v701, %v689
    %v954 = vpack.c.b16 %v702, %v690
    %v955 = vpack.c.b16 %v703, %v691
    %v956 = vpack.c.b16 %v704, %v692
    %v957 = vpack.c.b16 %v705, %v693
    %v958 = vpack.c.b16 %v706, %v694
    %v959 = vpack.c.b16 %v707, %v695
    %v960 = vpack.c.b16 %v708, %v696
    %v961 = vpack.c.b16 %v709, %v697
    %v962 = vpack.c.b16 %v710, %v698
    %v963 = vpack.c.b16 %v711, %v699
    %v964 = vpack.c.b16 %v724, %v712
    %v965 = vpack.c.b16 %v725, %v713
    %v966 = vpack.c.b16 %v726, %v714
    %v967 = vpack.c.b16 %v727, %v715
    %v968 = vpack.c.b16 %v728, %v716
    %v969 = vpack.c.b16 %v729, %v717
    %v970 = vpack.c.b16 %v730, %v718
    %v971 = vpack.c.b16 %v731, %v719
    %v972 = vpack.c.b16 %v732, %v720
    %v973 = vpack.c.b16 %v733, %v721
    %v974 = vpack.c.b16 %v734, %v722
    %v975 = vpack.c.b16 %v735, %v723
    %v976 = vpack.c.b16 %v748, %v736
    %v977 = vpack.c.b16 %v749, %v737
    %v978 = vpack.c.b16 %v750, %v738
    %v979 = vpack.c.b16 %v751, %v739
    %v980 = vpack.c.b16 %v752, %v740
    %v981 = vpack.c.b16 %v753, %v741
    %v982 = vpack.c.b16 %v754, %v742
    %v983 = vpack.c.b16 %v755, %v743
    %v984 = vpack.c.b16 %v756, %v744
    %v985 = vpack.c.b16 %v757, %v745
    %v986 = vpack.c.b16 %v758, %v746
    %v987 = vpack.c.b16 %v759, %v747
    %v988 = vpack.c.b16 %v772, %v760
    %v989 = vpack.c.b16 %v773, %v761
    %v990 = vpack.c.b16 %v774, %v762
    %v991 = vpack.c.b16 %v775, %v763
    %v992 = vpack.c.b16 %v776, %v764
    %v993 = vpack.c.b16 %v777, %v765
    %v994 = vpack.c.b16 %v778, %v766
    %v995 = vpack.c.b16 %v779, %v767
    %v996 = vpack.c.b16 %v780, %v768
    %v997 = vpack.c.b16 %v781, %v769
    %v998 = vpack.c.b16 %v782, %v770
    %v999 = vpack.c.b16 %v783, %v771
    %v1000 = vpack.c.b16 %v796, %v784
    %v1001 = vpack.c.b16 %v797, %v785
    %v1002 = vpack.c.b16 %v798, %v786
    %v1003 = vpack.c.b16 %v799, %v787
    %v1004 = vpack.c.b16 %v800, %v788
    %v1005 = vpack.c.b16 %v801, %v789
    %v1006 = vpack.c.b16 %v802, %v790
    %v1007 = vpack.c.b16 %v803, %v791
    %v1008 = vpack.c.b16 %v804, %v792
    %v1009 = vpack.c.b16 %v805, %v793
    %v1010 = vpack.c.b16 %v806, %v794
    %v1011 = vpack.c.b16 %v807, %v795
    %v1012 = vpack.c.b16 %v820, %v808
    %v1013 = vpack.c.b16 %v821, %v809
    %v1014 = vpack.c.b16 %v822, %v810
    %v1015 = vpack.c.b16 %v823, %v811
    %v1016 = vpack.c.b16 %v824, %v812
    %v1017 = vpack.c.b16 %v825, %v813
    %v1018 = vpack.c.b16 %v826, %v814
    %v1019 = vpack.c.b16 %v827, %v815
    %v1020 = vpack.c.b16 %v828, %v816
    %v1021 = vpack.c.b16 %v829, %v817
    %v1022 = vpack.c.b16 %v830, %v818
    %v1023 = vpack.c.b16 %v831, %v819
    %1216 = vmatprep.subr.bf16.mxu0 %v917
    %1217 = vmatpush1.bf16.msra.mxu0 %v916
    %1218 = vmatprep.subr.bf16.mxu0 %v905
    %1219 = vmatpush1.bf16.msra.mxu0 %v904
    %1220 = vmatprep.subr.bf16.mxu0 %v893
    %1221 = vmatpush1.bf16.msra.mxu0 %v892
    %1222 = vmatprep.subr.bf16.mxu0 %v881
    %1223 = vmatpush1.bf16.msra.mxu0 %v880
    %1224 = vmatprep.subr.bf16.mxu0 %v869
    %1225 = vmatpush1.bf16.msra.mxu0 %v868
    %1226 = vmatprep.subr.bf16.mxu0 %v857
    %1227 = vmatpush1.bf16.msra.mxu0 %v856
    %1228 = vmatprep.subr.bf16.mxu0 %v845
    %1229 = vmatpush1.bf16.msra.mxu0 %v844
    %1230 = vmatprep.subr.bf16.mxu0 %v833
    %1231 = vmatpush1.bf16.msra.mxu0 %v832
    %1232 = vmatprep.subr.bf16.mxu0 %v1013
    %1233 = vmatpush2.bf16.msra.mxu0 %v1012
    %1234 = vmatprep.subr.bf16.mxu0 %v1001
    %1235 = vmatpush2.bf16.msra.mxu0 %v1000
    %1236 = vmatprep.subr.bf16.mxu0 %v989
    %1237 = vmatpush2.bf16.msra.mxu0 %v988
    %1238 = vmatprep.subr.bf16.mxu0 %v977
    %1239 = vmatpush2.bf16.msra.mxu0 %v976
    %1240 = vmatprep.subr.bf16.mxu0 %v965
    %1241 = vmatpush2.bf16.msra.mxu0 %v964
    %1242 = vmatprep.subr.bf16.mxu0 %v953
    %1243 = vmatpush2.bf16.msra.mxu0 %v952
    %1244 = vmatprep.subr.bf16.mxu0 %v941
    %1245 = vmatpush2.bf16.msra.mxu0 %v940
    %1246 = vmatprep.subr.bf16.mxu0 %v929
    %1247 = vmatpush2.bf16.msra.mxu0 %v928
    %1248 = vmatprep.mubr.bf16.mxu0 %v253
    %1249 = vmatmul.mubr.bf16.gmra.mxu0 %v252
    %v1250 = vpop.f32.mrf.mxu0
    %v1251 = vadd.f32 0.0, %v1250
    %v1252 = vpop.f32.mrf.mxu0
    %v1253 = vadd.f32 0.0, %v1252
    %v1254 = vpop.f32.mrf.mxu0
    %v1255 = vpop.f32.mrf.mxu0
    %1256 = vdwg.mxu0
    %1257 = vmatprep.subr.bf16.mxu0 %v919
    %1258 = vmatpush1.bf16.msra.mxu0 %v918
    %1259 = vmatprep.subr.bf16.mxu0 %v907
    %1260 = vmatpush1.bf16.msra.mxu0 %v906
    %1261 = vmatprep.subr.bf16.mxu0 %v895
    %1262 = vmatpush1.bf16.msra.mxu0 %v894
    %1263 = vmatprep.subr.bf16.mxu0 %v883
    %1264 = vmatpush1.bf16.msra.mxu0 %v882
    %1265 = vmatprep.subr.bf16.mxu0 %v871
    %1266 = vmatpush1.bf16.msra.mxu0 %v870
    %1267 = vmatprep.subr.bf16.mxu0 %v859
    %1268 = vmatpush1.bf16.msra.mxu0 %v858
    %1269 = vmatprep.subr.bf16.mxu0 %v847
    %1270 = vmatpush1.bf16.msra.mxu0 %v846
    %1271 = vmatprep.subr.bf16.mxu0 %v835
    %1272 = vmatpush1.bf16.msra.mxu0 %v834
    %1273 = vmatprep.subr.bf16.mxu0 %v1015
    %1274 = vmatpush2.bf16.msra.mxu0 %v1014
    %1275 = vmatprep.subr.bf16.mxu0 %v1003
    %1276 = vmatpush2.bf16.msra.mxu0 %v1002
    %1277 = vmatprep.subr.bf16.mxu0 %v991
    %1278 = vmatpush2.bf16.msra.mxu0 %v990
    %1279 = vmatprep.subr.bf16.mxu0 %v979
    %1280 = vmatpush2.bf16.msra.mxu0 %v978
    %1281 = vmatprep.subr.bf16.mxu0 %v967
    %1282 = vmatpush2.bf16.msra.mxu0 %v966
    %1283 = vmatprep.subr.bf16.mxu0 %v955
    %1284 = vmatpush2.bf16.msra.mxu0 %v954
    %1285 = vmatprep.subr.bf16.mxu0 %v943
    %1286 = vmatpush2.bf16.msra.mxu0 %v942
    %1287 = vmatprep.subr.bf16.mxu0 %v931
    %1288 = vmatpush2.bf16.msra.mxu0 %v930
    %1289 = vmatprep.mubr.bf16.mxu0 %v253
    %1290 = vmatmul.mubr.bf16.gmra.mxu0 %v252
    %v1291 = vpop.f32.mrf.mxu0
    %v1292 = vadd.f32 0.0, %v1291
    %v1293 = vpop.f32.mrf.mxu0
    %v1294 = vadd.f32 0.0, %v1293
    %v1295 = vpop.f32.mrf.mxu0
    %v1296 = vpop.f32.mrf.mxu0
    %1297 = vdwg.mxu0
    %1298 = vmatprep.subr.bf16.mxu0 %v921
    %1299 = vmatpush1.bf16.msra.mxu0 %v920
    %1300 = vmatprep.subr.bf16.mxu0 %v909
    %1301 = vmatpush1.bf16.msra.mxu0 %v908
    %1302 = vmatprep.subr.bf16.mxu0 %v897
    %1303 = vmatpush1.bf16.msra.mxu0 %v896
    %1304 = vmatprep.subr.bf16.mxu0 %v885
    %1305 = vmatpush1.bf16.msra.mxu0 %v884
    %1306 = vmatprep.subr.bf16.mxu0 %v873
    %1307 = vmatpush1.bf16.msra.mxu0 %v872
    %1308 = vmatprep.subr.bf16.mxu0 %v861
    %1309 = vmatpush1.bf16.msra.mxu0 %v860
    %1310 = vmatprep.subr.bf16.mxu0 %v849
    %1311 = vmatpush1.bf16.msra.mxu0 %v848
    %1312 = vmatprep.subr.bf16.mxu0 %v837
    %1313 = vmatpush1.bf16.msra.mxu0 %v836
    %1314 = vmatprep.subr.bf16.mxu0 %v1017
    %1315 = vmatpush2.bf16.msra.mxu0 %v1016
    %1316 = vmatprep.subr.bf16.mxu0 %v1005
    %1317 = vmatpush2.bf16.msra.mxu0 %v1004
    %1318 = vmatprep.subr.bf16.mxu0 %v993
    %1319 = vmatpush2.bf16.msra.mxu0 %v992
    %1320 = vmatprep.subr.bf16.mxu0 %v981
    %1321 = vmatpush2.bf16.msra.mxu0 %v980
    %1322 = vmatprep.subr.bf16.mxu0 %v969
    %1323 = vmatpush2.bf16.msra.mxu0 %v968
    %1324 = vmatprep.subr.bf16.mxu0 %v957
    %1325 = vmatpush2.bf16.msra.mxu0 %v956
    %1326 = vmatprep.subr.bf16.mxu0 %v945
    %1327 = vmatpush2.bf16.msra.mxu0 %v944
    %1328 = vmatprep.subr.bf16.mxu0 %v933
    %1329 = vmatpush2.bf16.msra.mxu0 %v932
    %1330 = vmatprep.mubr.bf16.mxu0 %v253
    %1331 = vmatmul.mubr.bf16.gmra.mxu0 %v252
    %v1332 = vpop.f32.mrf.mxu0
    %v1333 = vadd.f32 0.0, %v1332
    %v1334 = vpop.f32.mrf.mxu0
    %v1335 = vadd.f32 0.0, %v1334
    %v1336 = vpop.f32.mrf.mxu0
    %v1337 = vpop.f32.mrf.mxu0
    %1338 = vdwg.mxu0
    %1339 = vmatprep.subr.bf16.mxu0 %v923
    %1340 = vmatpush1.bf16.msra.mxu0 %v922
    %1341 = vmatprep.subr.bf16.mxu0 %v911
    %1342 = vmatpush1.bf16.msra.mxu0 %v910
    %1343 = vmatprep.subr.bf16.mxu0 %v899
    %1344 = vmatpush1.bf16.msra.mxu0 %v898
    %1345 = vmatprep.subr.bf16.mxu0 %v887
    %1346 = vmatpush1.bf16.msra.mxu0 %v886
    %1347 = vmatprep.subr.bf16.mxu0 %v875
    %1348 = vmatpush1.bf16.msra.mxu0 %v874
    %1349 = vmatprep.subr.bf16.mxu0 %v863
    %1350 = vmatpush1.bf16.msra.mxu0 %v862
    %1351 = vmatprep.subr.bf16.mxu0 %v851
    %1352 = vmatpush1.bf16.msra.mxu0 %v850
    %1353 = vmatprep.subr.bf16.mxu0 %v839
    %1354 = vmatpush1.bf16.msra.mxu0 %v838
    %1355 = vmatprep.subr.bf16.mxu0 %v1019
    %1356 = vmatpush2.bf16.msra.mxu0 %v1018
    %1357 = vmatprep.subr.bf16.mxu0 %v1007
    %1358 = vmatpush2.bf16.msra.mxu0 %v1006
    %1359 = vmatprep.subr.bf16.mxu0 %v995
    %1360 = vmatpush2.bf16.msra.mxu0 %v994
    %1361 = vmatprep.subr.bf16.mxu0 %v983
    %1362 = vmatpush2.bf16.msra.mxu0 %v982
    %1363 = vmatprep.subr.bf16.mxu0 %v971
    %1364 = vmatpush2.bf16.msra.mxu0 %v970
    %1365 = vmatprep.subr.bf16.mxu0 %v959
    %1366 = vmatpush2.bf16.msra.mxu0 %v958
    %1367 = vmatprep.subr.bf16.mxu0 %v947
    %1368 = vmatpush2.bf16.msra.mxu0 %v946
    %1369 = vmatprep.subr.bf16.mxu0 %v935
    %1370 = vmatpush2.bf16.msra.mxu0 %v934
    %1371 = vmatprep.mubr.bf16.mxu0 %v253
    %1372 = vmatmul.mubr.bf16.gmra.mxu0 %v252
    %v1373 = vpop.f32.mrf.mxu0
    %v1374 = vadd.f32 0.0, %v1373
    %v1375 = vpop.f32.mrf.mxu0
    %v1376 = vadd.f32 0.0, %v1375
    %v1377 = vpop.f32.mrf.mxu0
    %v1378 = vpop.f32.mrf.mxu0
    %1379 = vdwg.mxu0
    %1380 = vmatprep.subr.bf16.mxu0 %v925
    %1381 = vmatpush1.bf16.msra.mxu0 %v924
    %1382 = vmatprep.subr.bf16.mxu0 %v913
    %1383 = vmatpush1.bf16.msra.mxu0 %v912
    %1384 = vmatprep.subr.bf16.mxu0 %v901
    %1385 = vmatpush1.bf16.msra.mxu0 %v900
    %1386 = vmatprep.subr.bf16.mxu0 %v889
    %1387 = vmatpush1.bf16.msra.mxu0 %v888
    %1388 = vmatprep.subr.bf16.mxu0 %v877
    %1389 = vmatpush1.bf16.msra.mxu0 %v876
    %1390 = vmatprep.subr.bf16.mxu0 %v865
    %1391 = vmatpush1.bf16.msra.mxu0 %v864
    %1392 = vmatprep.subr.bf16.mxu0 %v853
    %1393 = vmatpush1.bf16.msra.mxu0 %v852
    %1394 = vmatprep.subr.bf16.mxu0 %v841
    %1395 = vmatpush1.bf16.msra.mxu0 %v840
    %1396 = vmatprep.subr.bf16.mxu0 %v1021
    %1397 = vmatpush2.bf16.msra.mxu0 %v1020
    %1398 = vmatprep.subr.bf16.mxu0 %v1009
    %1399 = vmatpush2.bf16.msra.mxu0 %v1008
    %1400 = vmatprep.subr.bf16.mxu0 %v997
    %1401 = vmatpush2.bf16.msra.mxu0 %v996
    %1402 = vmatprep.subr.bf16.mxu0 %v985
    %1403 = vmatpush2.bf16.msra.mxu0 %v984
    %1404 = vmatprep.subr.bf16.mxu0 %v973
    %1405 = vmatpush2.bf16.msra.mxu0 %v972
    %1406 = vmatprep.subr.bf16.mxu0 %v961
    %1407 = vmatpush2.bf16.msra.mxu0 %v960
    %1408 = vmatprep.subr.bf16.mxu0 %v949
    %1409 = vmatpush2.bf16.msra.mxu0 %v948
    %1410 = vmatprep.subr.bf16.mxu0 %v937
    %1411 = vmatpush2.bf16.msra.mxu0 %v936
    %1412 = vmatprep.mubr.bf16.mxu0 %v253
    %1413 = vmatmul.mubr.bf16.gmra.mxu0 %v252
    %v1414 = vpop.f32.mrf.mxu0
    %v1415 = vadd.f32 0.0, %v1414
    %v1416 = vpop.f32.mrf.mxu0
    %v1417 = vadd.f32 0.0, %v1416
    %v1418 = vpop.f32.mrf.mxu0
    %v1419 = vpop.f32.mrf.mxu0
    %1420 = vdwg.mxu0
    %1421 = vmatprep.subr.bf16.mxu0 %v927
    %1422 = vmatpush1.bf16.msra.mxu0 %v926
    %1423 = vmatprep.subr.bf16.mxu0 %v915
    %1424 = vmatpush1.bf16.msra.mxu0 %v914
    %1425 = vmatprep.subr.bf16.mxu0 %v903
    %1426 = vmatpush1.bf16.msra.mxu0 %v902
    %1427 = vmatprep.subr.bf16.mxu0 %v891
    %1428 = vmatpush1.bf16.msra.mxu0 %v890
    %1429 = vmatprep.subr.bf16.mxu0 %v879
    %1430 = vmatpush1.bf16.msra.mxu0 %v878
    %1431 = vmatprep.subr.bf16.mxu0 %v867
    %1432 = vmatpush1.bf16.msra.mxu0 %v866
    %1433 = vmatprep.subr.bf16.mxu0 %v855
    %1434 = vmatpush1.bf16.msra.mxu0 %v854
    %1435 = vmatprep.subr.bf16.mxu0 %v843
    %1436 = vmatpush1.bf16.msra.mxu0 %v842
    %1437 = vmatprep.subr.bf16.mxu0 %v1023
    %1438 = vmatpush2.bf16.msra.mxu0 %v1022
    %1439 = vmatprep.subr.bf16.mxu0 %v1011
    %1440 = vmatpush2.bf16.msra.mxu0 %v1010
    %1441 = vmatprep.subr.bf16.mxu0 %v999
    %1442 = vmatpush2.bf16.msra.mxu0 %v998
    %1443 = vmatprep.subr.bf16.mxu0 %v987
    %1444 = vmatpush2.bf16.msra.mxu0 %v986
    %1445 = vmatprep.subr.bf16.mxu0 %v975
    %1446 = vmatpush2.bf16.msra.mxu0 %v974
    %1447 = vmatprep.subr.bf16.mxu0 %v963
    %1448 = vmatpush2.bf16.msra.mxu0 %v962
    %1449 = vmatprep.subr.bf16.mxu0 %v951
    %1450 = vmatpush2.bf16.msra.mxu0 %v950
    %1451 = vmatprep.subr.bf16.mxu0 %v939
    %1452 = vmatpush2.bf16.msra.mxu0 %v938
    %1453 = vmatprep.mubr.bf16.mxu0 %v253
    %1454 = vmatmul.mubr.bf16.gmra.mxu0 %v252
    %v1455 = vpop.f32.mrf.mxu0
    %v1456 = vadd.f32 0.0, %v1455
    %v1457 = vpop.f32.mrf.mxu0
    %v1458 = vadd.f32 0.0, %v1457
    %v1459 = vpop.f32.mrf.mxu0
    %v1460 = vpop.f32.mrf.mxu0
    %1461 = vdwg.mxu0
    %v1462 = vmax.f32 %v1251, %v1294
    %v1463 = vmax.f32 %v1253, %v1333
    %v1464 = vmax.f32 %v1292, %v1335
    %v1465 = vmax.f32 %v1374, %v1417
    %v1466 = vmax.f32 %v1376, %v1456
    %v1467 = vmax.f32 %v1415, %v1458
    %v1468 = vmax.f32 %v1462, %v1465
    %v1469 = vmax.f32 %v1463, %v1466
    %v1470 = vmax.f32 %v1464, %v1467
    %v1471 = vld [vmem:[%s2] sm:$0x7]
    %v1473 = vlaneseq
    %v1474 = vshrl.u32 %v1473, 7
    %v1475 = vsub.s32 0, %v1474
    %v1476 = vrot.slane %v1471, %v1475
    %v1477 = vlaneseq
    %v1478 = vshrl.u32 %v1477, 7
    %v1479 = vsub.s32 1, %v1478
    %v1480 = vrot.slane %v1471, %v1479
    %v1481 = vlaneseq
    %v1482 = vshrl.u32 %v1481, 7
    %v1483 = vsub.s32 2, %v1482
    %v1484 = vrot.slane %v1471, %v1483
    %v1488 = vadd.f32 %v1468, %v1476
    %v1489 = vadd.f32 %v1469, %v1480
    %v1490 = vadd.f32 %v1470, %v1484
    %v1491 = vmax.f32 %v1488, 0.0
    %v1492 = vmax.f32 %v1489, 0.0
    %v1493 = vmax.f32 %v1490, 0.0
    %v1494 = vpack.c.bf16 %v1491, %v1491
    %v1495 = vpack.c.bf16 %v1492, %v1492
    %v1496 = vpack.c.bf16 %v1493, %v1493
    %v1497 = vld [vmem:[#allocation6] sm:$0xff]
    %v1498 = vld [vmem:[#allocation6 + $0x8] sm:$0xff]
    %v1499 = vld [vmem:[#allocation6 + $0x10] sm:$0xff]
    %v1500 = vld [vmem:[#allocation6 + $0x18] sm:$0xff]
    %v1501 = vld [vmem:[#allocation6 + $0x20] sm:$0xff]
    %v1502 = vld [vmem:[#allocation6 + $0x28] sm:$0xff]
    %v1503 = vld [vmem:[#allocation6 + $0x30] sm:$0xff]
    %v1504 = vld [vmem:[#allocation6 + $0x38] sm:$0xff]
    %v1505 = vld [vmem:[#allocation6 + $0x40] sm:$0xff]
    %v1506 = vld [vmem:[#allocation6 + $0x48] sm:$0xff]
    %v1507 = vld [vmem:[#allocation6 + $0x50] sm:$0xff]
    %v1508 = vld [vmem:[#allocation6 + $0x58] sm:$0xff]
    %v1509 = vld [vmem:[#allocation6 + $0x60] sm:$0xff]
    %v1510 = vld [vmem:[#allocation6 + $0x68] sm:$0xff]
    %v1511 = vld [vmem:[#allocation6 + $0x70] sm:$0xff]
    %v1512 = vld [vmem:[#allocation6 + $0x78] sm:$0xff]
    %v1513 = vld [vmem:[#allocation6 + $0x80] sm:$0xff]
    %v1514 = vld [vmem:[#allocation6 + $0x88] sm:$0xff]
    %v1515 = vld [vmem:[#allocation6 + $0x90] sm:$0xff]
    %v1516 = vld [vmem:[#allocation6 + $0x98] sm:$0xff]
    %v1517 = vld [vmem:[#allocation6 + $0xa0] sm:$0xff]
    %v1518 = vld [vmem:[#allocation6 + $0xa8] sm:$0xff]
    %v1519 = vld [vmem:[#allocation6 + $0xb0] sm:$0xff]
    %v1520 = vld [vmem:[#allocation6 + $0xb8] sm:$0xff]
    %v1521 = vld [vmem:[#allocation6 + $0xc0] sm:$0xff]
    %v1522 = vld [vmem:[#allocation6 + $0xc8] sm:$0xff]
    %v1523 = vld [vmem:[#allocation6 + $0xd0] sm:$0xff]
    %v1524 = vld [vmem:[#allocation6 + $0xd8] sm:$0xff]
    %v1525 = vld [vmem:[#allocation6 + $0xe0] sm:$0xff]
    %v1526 = vld [vmem:[#allocation6 + $0xe8] sm:$0xff]
    %v1527 = vld [vmem:[#allocation6 + $0xf0] sm:$0xff]
    %v1528 = vld [vmem:[#allocation6 + $0xf8] sm:$0xff]
    %v1529 = vld [vmem:[#allocation6 + $0x100] sm:$0xff]
    %v1530 = vld [vmem:[#allocation6 + $0x108] sm:$0xff]
    %v1531 = vld [vmem:[#allocation6 + $0x110] sm:$0xff]
    %v1532 = vld [vmem:[#allocation6 + $0x118] sm:$0xff]
    %v1533 = vld [vmem:[#allocation6 + $0x120] sm:$0xff]
    %v1534 = vld [vmem:[#allocation6 + $0x128] sm:$0xff]
    %v1535 = vld [vmem:[#allocation6 + $0x130] sm:$0xff]
    %v1536 = vld [vmem:[#allocation6 + $0x138] sm:$0xff]
    %v1537 = vld [vmem:[#allocation6 + $0x140] sm:$0xff]
    %v1538 = vld [vmem:[#allocation6 + $0x148] sm:$0xff]
    %v1539 = vld [vmem:[#allocation6 + $0x150] sm:$0xff]
    %v1540 = vld [vmem:[#allocation6 + $0x158] sm:$0xff]
    %v1541 = vld [vmem:[#allocation6 + $0x160] sm:$0xff]
    %v1542 = vld [vmem:[#allocation6 + $0x168] sm:$0xff]
    %v1543 = vld [vmem:[#allocation6 + $0x170] sm:$0xff]
    %v1544 = vld [vmem:[#allocation6 + $0x178] sm:$0xff]
    %v1545 = vld [vmem:[#allocation6 + $0x180] sm:$0xff]
    %v1546 = vld [vmem:[#allocation6 + $0x188] sm:$0xff]
    %v1547 = vld [vmem:[#allocation6 + $0x190] sm:$0xff]
    %v1548 = vld [vmem:[#allocation6 + $0x198] sm:$0xff]
    %v1549 = vld [vmem:[#allocation6 + $0x1a0] sm:$0xff]
    %v1550 = vld [vmem:[#allocation6 + $0x1a8] sm:$0xff]
    %v1551 = vld [vmem:[#allocation6 + $0x1b0] sm:$0xff]
    %v1552 = vld [vmem:[#allocation6 + $0x1b8] sm:$0xff]
    %v1553 = vld [vmem:[#allocation6 + $0x1c0] sm:$0xff]
    %v1554 = vld [vmem:[#allocation6 + $0x1c8] sm:$0xff]
    %v1555 = vld [vmem:[#allocation6 + $0x1d0] sm:$0xff]
    %v1556 = vld [vmem:[#allocation6 + $0x1d8] sm:$0xff]
    %v1557 = vld [vmem:[#allocation6 + $0x1e0] sm:$0xff]
    %v1558 = vld [vmem:[#allocation6 + $0x1e8] sm:$0xff]
    %v1559 = vld [vmem:[#allocation6 + $0x1f0] sm:$0xff]
    %v1560 = vld [vmem:[#allocation6 + $0x1f8] sm:$0xff]
    %v1561 = vld [vmem:[#allocation6 + $0x200] sm:$0xff]
    %v1562 = vld [vmem:[#allocation6 + $0x208] sm:$0xff]
    %v1563 = vld [vmem:[#allocation6 + $0x210] sm:$0xff]
    %v1564 = vld [vmem:[#allocation6 + $0x218] sm:$0xff]
    %v1565 = vld [vmem:[#allocation6 + $0x220] sm:$0xff]
    %v1566 = vld [vmem:[#allocation6 + $0x228] sm:$0xff]
    %v1567 = vld [vmem:[#allocation6 + $0x230] sm:$0xff]
    %v1568 = vld [vmem:[#allocation6 + $0x238] sm:$0xff]
    %v1569 = vld [vmem:[#allocation6 + $0x240] sm:$0xff]
    %v1570 = vld [vmem:[#allocation6 + $0x248] sm:$0xff]
    %v1571 = vld [vmem:[#allocation6 + $0x250] sm:$0xff]
    %v1572 = vld [vmem:[#allocation6 + $0x258] sm:$0xff]
    %v1573 = vld [vmem:[#allocation6 + $0x260] sm:$0xff]
    %v1574 = vld [vmem:[#allocation6 + $0x268] sm:$0xff]
    %v1575 = vld [vmem:[#allocation6 + $0x270] sm:$0xff]
    %v1576 = vld [vmem:[#allocation6 + $0x278] sm:$0xff]
    %v1577 = vld [vmem:[#allocation6 + $0x280] sm:$0xff]
    %v1578 = vld [vmem:[#allocation6 + $0x288] sm:$0xff]
    %v1579 = vld [vmem:[#allocation6 + $0x290] sm:$0xff]
    %v1580 = vld [vmem:[#allocation6 + $0x298] sm:$0xff]
    %v1581 = vld [vmem:[#allocation6 + $0x2a0] sm:$0xff]
    %v1582 = vld [vmem:[#allocation6 + $0x2a8] sm:$0xff]
    %v1583 = vld [vmem:[#allocation6 + $0x2b0] sm:$0xff]
    %v1584 = vld [vmem:[#allocation6 + $0x2b8] sm:$0xff]
    %v1585 = vld [vmem:[#allocation6 + $0x2c0] sm:$0xff]
    %v1586 = vld [vmem:[#allocation6 + $0x2c8] sm:$0xff]
    %v1587 = vld [vmem:[#allocation6 + $0x2d0] sm:$0xff]
    %v1588 = vld [vmem:[#allocation6 + $0x2d8] sm:$0xff]
    %v1589 = vld [vmem:[#allocation6 + $0x2e0] sm:$0xff]
    %v1590 = vld [vmem:[#allocation6 + $0x2e8] sm:$0xff]
    %v1591 = vld [vmem:[#allocation6 + $0x2f0] sm:$0xff]
    %v1592 = vld [vmem:[#allocation6 + $0x2f8] sm:$0xff]
    %v1689 = vunpack.c.l.b16 %v1497
    %v1690 = vunpack.c.h.b16 %v1497
    %v1691 = vunpack.c.l.b16 %v1498
    %v1692 = vunpack.c.h.b16 %v1498
    %v1693 = vunpack.c.l.b16 %v1499
    %v1694 = vunpack.c.h.b16 %v1499
    %v1695 = vunpack.c.l.b16 %v1500
    %v1696 = vunpack.c.h.b16 %v1500
    %v1697 = vunpack.c.l.b16 %v1501
    %v1698 = vunpack.c.h.b16 %v1501
    %v1699 = vunpack.c.l.b16 %v1502
    %v1700 = vunpack.c.h.b16 %v1502
    %v1701 = vunpack.c.l.b16 %v1503
    %v1702 = vunpack.c.h.b16 %v1503
    %v1703 = vunpack.c.l.b16 %v1504
    %v1704 = vunpack.c.h.b16 %v1504
    %v1705 = vunpack.c.l.b16 %v1505
    %v1706 = vunpack.c.h.b16 %v1505
    %v1707 = vunpack.c.l.b16 %v1506
    %v1708 = vunpack.c.h.b16 %v1506
    %v1709 = vunpack.c.l.b16 %v1507
    %v1710 = vunpack.c.h.b16 %v1507
    %v1711 = vunpack.c.l.b16 %v1508
    %v1712 = vunpack.c.h.b16 %v1508
    %v1713 = vunpack.c.l.b16 %v1509
    %v1714 = vunpack.c.h.b16 %v1509
    %v1715 = vunpack.c.l.b16 %v1510
    %v1716 = vunpack.c.h.b16 %v1510
    %v1717 = vunpack.c.l.b16 %v1511
    %v1718 = vunpack.c.h.b16 %v1511
    %v1719 = vunpack.c.l.b16 %v1512
    %v1720 = vunpack.c.h.b16 %v1512
    %v1721 = vunpack.c.l.b16 %v1513
    %v1722 = vunpack.c.h.b16 %v1513
    %v1723 = vunpack.c.l.b16 %v1514
    %v1724 = vunpack.c.h.b16 %v1514
    %v1725 = vunpack.c.l.b16 %v1515
    %v1726 = vunpack.c.h.b16 %v1515
    %v1727 = vunpack.c.l.b16 %v1516
    %v1728 = vunpack.c.h.b16 %v1516
    %v1729 = vunpack.c.l.b16 %v1517
    %v1730 = vunpack.c.h.b16 %v1517
    %v1731 = vunpack.c.l.b16 %v1518
    %v1732 = vunpack.c.h.b16 %v1518
    %v1733 = vunpack.c.l.b16 %v1519
    %v1734 = vunpack.c.h.b16 %v1519
    %v1735 = vunpack.c.l.b16 %v1520
    %v1736 = vunpack.c.h.b16 %v1520
    %v1737 = vunpack.c.l.b16 %v1521
    %v1738 = vunpack.c.h.b16 %v1521
    %v1739 = vunpack.c.l.b16 %v1522
    %v1740 = vunpack.c.h.b16 %v1522
    %v1741 = vunpack.c.l.b16 %v1523
    %v1742 = vunpack.c.h.b16 %v1523
    %v1743 = vunpack.c.l.b16 %v1524
    %v1744 = vunpack.c.h.b16 %v1524
    %v1745 = vunpack.c.l.b16 %v1525
    %v1746 = vunpack.c.h.b16 %v1525
    %v1747 = vunpack.c.l.b16 %v1526
    %v1748 = vunpack.c.h.b16 %v1526
    %v1749 = vunpack.c.l.b16 %v1527
    %v1750 = vunpack.c.h.b16 %v1527
    %v1751 = vunpack.c.l.b16 %v1528
    %v1752 = vunpack.c.h.b16 %v1528
    %v1753 = vunpack.c.l.b16 %v1529
    %v1754 = vunpack.c.h.b16 %v1529
    %v1755 = vunpack.c.l.b16 %v1530
    %v1756 = vunpack.c.h.b16 %v1530
    %v1757 = vunpack.c.l.b16 %v1531
    %v1758 = vunpack.c.h.b16 %v1531
    %v1759 = vunpack.c.l.b16 %v1532
    %v1760 = vunpack.c.h.b16 %v1532
    %v1761 = vunpack.c.l.b16 %v1533
    %v1762 = vunpack.c.h.b16 %v1533
    %v1763 = vunpack.c.l.b16 %v1534
    %v1764 = vunpack.c.h.b16 %v1534
    %v1765 = vunpack.c.l.b16 %v1535
    %v1766 = vunpack.c.h.b16 %v1535
    %v1767 = vunpack.c.l.b16 %v1536
    %v1768 = vunpack.c.h.b16 %v1536
    %v1769 = vunpack.c.l.b16 %v1537
    %v1770 = vunpack.c.h.b16 %v1537
    %v1771 = vunpack.c.l.b16 %v1538
    %v1772 = vunpack.c.h.b16 %v1538
    %v1773 = vunpack.c.l.b16 %v1539
    %v1774 = vunpack.c.h.b16 %v1539
    %v1775 = vunpack.c.l.b16 %v1540
    %v1776 = vunpack.c.h.b16 %v1540
    %v1777 = vunpack.c.l.b16 %v1541
    %v1778 = vunpack.c.h.b16 %v1541
    %v1779 = vunpack.c.l.b16 %v1542
    %v1780 = vunpack.c.h.b16 %v1542
    %v1781 = vunpack.c.l.b16 %v1543
    %v1782 = vunpack.c.h.b16 %v1543
    %v1783 = vunpack.c.l.b16 %v1544
    %v1784 = vunpack.c.h.b16 %v1544
    %v1785 = vunpack.c.l.b16 %v1545
    %v1786 = vunpack.c.h.b16 %v1545
    %v1787 = vunpack.c.l.b16 %v1546
    %v1788 = vunpack.c.h.b16 %v1546
    %v1789 = vunpack.c.l.b16 %v1547
    %v1790 = vunpack.c.h.b16 %v1547
    %v1791 = vunpack.c.l.b16 %v1548
    %v1792 = vunpack.c.h.b16 %v1548
    %v1793 = vunpack.c.l.b16 %v1549
    %v1794 = vunpack.c.h.b16 %v1549
    %v1795 = vunpack.c.l.b16 %v1550
    %v1796 = vunpack.c.h.b16 %v1550
    %v1797 = vunpack.c.l.b16 %v1551
    %v1798 = vunpack.c.h.b16 %v1551
    %v1799 = vunpack.c.l.b16 %v1552
    %v1800 = vunpack.c.h.b16 %v1552
    %v1801 = vunpack.c.l.b16 %v1553
    %v1802 = vunpack.c.h.b16 %v1553
    %v1803 = vunpack.c.l.b16 %v1554
    %v1804 = vunpack.c.h.b16 %v1554
    %v1805 = vunpack.c.l.b16 %v1555
    %v1806 = vunpack.c.h.b16 %v1555
    %v1807 = vunpack.c.l.b16 %v1556
    %v1808 = vunpack.c.h.b16 %v1556
    %v1809 = vunpack.c.l.b16 %v1557
    %v1810 = vunpack.c.h.b16 %v1557
    %v1811 = vunpack.c.l.b16 %v1558
    %v1812 = vunpack.c.h.b16 %v1558
    %v1813 = vunpack.c.l.b16 %v1559
    %v1814 = vunpack.c.h.b16 %v1559
    %v1815 = vunpack.c.l.b16 %v1560
    %v1816 = vunpack.c.h.b16 %v1560
    %v1817 = vunpack.c.l.b16 %v1561
    %v1818 = vunpack.c.h.b16 %v1561
    %v1819 = vunpack.c.l.b16 %v1562
    %v1820 = vunpack.c.h.b16 %v1562
    %v1821 = vunpack.c.l.b16 %v1563
    %v1822 = vunpack.c.h.b16 %v1563
    %v1823 = vunpack.c.l.b16 %v1564
    %v1824 = vunpack.c.h.b16 %v1564
    %v1825 = vunpack.c.l.b16 %v1565
    %v1826 = vunpack.c.h.b16 %v1565
    %v1827 = vunpack.c.l.b16 %v1566
    %v1828 = vunpack.c.h.b16 %v1566
    %v1829 = vunpack.c.l.b16 %v1567
    %v1830 = vunpack.c.h.b16 %v1567
    %v1831 = vunpack.c.l.b16 %v1568
    %v1832 = vunpack.c.h.b16 %v1568
    %v1833 = vunpack.c.l.b16 %v1569
    %v1834 = vunpack.c.h.b16 %v1569
    %v1835 = vunpack.c.l.b16 %v1570
    %v1836 = vunpack.c.h.b16 %v1570
    %v1837 = vunpack.c.l.b16 %v1571
    %v1838 = vunpack.c.h.b16 %v1571
    %v1839 = vunpack.c.l.b16 %v1572
    %v1840 = vunpack.c.h.b16 %v1572
    %v1841 = vunpack.c.l.b16 %v1573
    %v1842 = vunpack.c.h.b16 %v1573
    %v1843 = vunpack.c.l.b16 %v1574
    %v1844 = vunpack.c.h.b16 %v1574
    %v1845 = vunpack.c.l.b16 %v1575
    %v1846 = vunpack.c.h.b16 %v1575
    %v1847 = vunpack.c.l.b16 %v1576
    %v1848 = vunpack.c.h.b16 %v1576
    %v1849 = vunpack.c.l.b16 %v1577
    %v1850 = vunpack.c.h.b16 %v1577
    %v1851 = vunpack.c.l.b16 %v1578
    %v1852 = vunpack.c.h.b16 %v1578
    %v1853 = vunpack.c.l.b16 %v1579
    %v1854 = vunpack.c.h.b16 %v1579
    %v1855 = vunpack.c.l.b16 %v1580
    %v1856 = vunpack.c.h.b16 %v1580
    %v1857 = vunpack.c.l.b16 %v1581
    %v1858 = vunpack.c.h.b16 %v1581
    %v1859 = vunpack.c.l.b16 %v1582
    %v1860 = vunpack.c.h.b16 %v1582
    %v1861 = vunpack.c.l.b16 %v1583
    %v1862 = vunpack.c.h.b16 %v1583
    %v1863 = vunpack.c.l.b16 %v1584
    %v1864 = vunpack.c.h.b16 %v1584
    %v1865 = vunpack.c.l.b16 %v1585
    %v1866 = vunpack.c.h.b16 %v1585
    %v1867 = vunpack.c.l.b16 %v1586
    %v1868 = vunpack.c.h.b16 %v1586
    %v1869 = vunpack.c.l.b16 %v1587
    %v1870 = vunpack.c.h.b16 %v1587
    %v1871 = vunpack.c.l.b16 %v1588
    %v1872 = vunpack.c.h.b16 %v1588
    %v1873 = vunpack.c.l.b16 %v1589
    %v1874 = vunpack.c.h.b16 %v1589
    %v1875 = vunpack.c.l.b16 %v1590
    %v1876 = vunpack.c.h.b16 %v1590
    %v1877 = vunpack.c.l.b16 %v1591
    %v1878 = vunpack.c.h.b16 %v1591
    %v1879 = vunpack.c.l.b16 %v1592
    %v1880 = vunpack.c.h.b16 %v1592
    %v1881 = vpack.c.b16 %v1693, %v1689
    %v1882 = vpack.c.b16 %v1694, %v1690
    %v1883 = vpack.c.b16 %v1695, %v1691
    %v1884 = vpack.c.b16 %v1696, %v1692
    %v1885 = vpack.c.b16 %v1701, %v1697
    %v1886 = vpack.c.b16 %v1702, %v1698
    %v1887 = vpack.c.b16 %v1703, %v1699
    %v1888 = vpack.c.b16 %v1704, %v1700
    %v1889 = vpack.c.b16 %v1709, %v1705
    %v1890 = vpack.c.b16 %v1710, %v1706
    %v1891 = vpack.c.b16 %v1711, %v1707
    %v1892 = vpack.c.b16 %v1712, %v1708
    %v1893 = vpack.c.b16 %v1717, %v1713
    %v1894 = vpack.c.b16 %v1718, %v1714
    %v1895 = vpack.c.b16 %v1719, %v1715
    %v1896 = vpack.c.b16 %v1720, %v1716
    %v1897 = vpack.c.b16 %v1725, %v1721
    %v1898 = vpack.c.b16 %v1726, %v1722
    %v1899 = vpack.c.b16 %v1727, %v1723
    %v1900 = vpack.c.b16 %v1728, %v1724
    %v1901 = vpack.c.b16 %v1733, %v1729
    %v1902 = vpack.c.b16 %v1734, %v1730
    %v1903 = vpack.c.b16 %v1735, %v1731
    %v1904 = vpack.c.b16 %v1736, %v1732
    %v1905 = vpack.c.b16 %v1741, %v1737
    %v1906 = vpack.c.b16 %v1742, %v1738
    %v1907 = vpack.c.b16 %v1743, %v1739
    %v1908 = vpack.c.b16 %v1744, %v1740
    %v1909 = vpack.c.b16 %v1749, %v1745
    %v1910 = vpack.c.b16 %v1750, %v1746
    %v1911 = vpack.c.b16 %v1751, %v1747
    %v1912 = vpack.c.b16 %v1752, %v1748
    %v1913 = vpack.c.b16 %v1757, %v1753
    %v1914 = vpack.c.b16 %v1758, %v1754
    %v1915 = vpack.c.b16 %v1759, %v1755
    %v1916 = vpack.c.b16 %v1760, %v1756
    %v1917 = vpack.c.b16 %v1765, %v1761
    %v1918 = vpack.c.b16 %v1766, %v1762
    %v1919 = vpack.c.b16 %v1767, %v1763
    %v1920 = vpack.c.b16 %v1768, %v1764
    %v1921 = vpack.c.b16 %v1773, %v1769
    %v1922 = vpack.c.b16 %v1774, %v1770
    %v1923 = vpack.c.b16 %v1775, %v1771
    %v1924 = vpack.c.b16 %v1776, %v1772
    %v1925 = vpack.c.b16 %v1781, %v1777
    %v1926 = vpack.c.b16 %v1782, %v1778
    %v1927 = vpack.c.b16 %v1783, %v1779
    %v1928 = vpack.c.b16 %v1784, %v1780
    %v1929 = vpack.c.b16 %v1789, %v1785
    %v1930 = vpack.c.b16 %v1790, %v1786
    %v1931 = vpack.c.b16 %v1791, %v1787
    %v1932 = vpack.c.b16 %v1792, %v1788
    %v1933 = vpack.c.b16 %v1797, %v1793
    %v1934 = vpack.c.b16 %v1798, %v1794
    %v1935 = vpack.c.b16 %v1799, %v1795
    %v1936 = vpack.c.b16 %v1800, %v1796
    %v1937 = vpack.c.b16 %v1805, %v1801
    %v1938 = vpack.c.b16 %v1806, %v1802
    %v1939 = vpack.c.b16 %v1807, %v1803
    %v1940 = vpack.c.b16 %v1808, %v1804
    %v1941 = vpack.c.b16 %v1813, %v1809
    %v1942 = vpack.c.b16 %v1814, %v1810
    %v1943 = vpack.c.b16 %v1815, %v1811
    %v1944 = vpack.c.b16 %v1816, %v1812
    %v1945 = vpack.c.b16 %v1821, %v1817
    %v1946 = vpack.c.b16 %v1822, %v1818
    %v1947 = vpack.c.b16 %v1823, %v1819
    %v1948 = vpack.c.b16 %v1824, %v1820
    %v1949 = vpack.c.b16 %v1829, %v1825
    %v1950 = vpack.c.b16 %v1830, %v1826
    %v1951 = vpack.c.b16 %v1831, %v1827
    %v1952 = vpack.c.b16 %v1832, %v1828
    %v1953 = vpack.c.b16 %v1837, %v1833
    %v1954 = vpack.c.b16 %v1838, %v1834
    %v1955 = vpack.c.b16 %v1839, %v1835
    %v1956 = vpack.c.b16 %v1840, %v1836
    %v1957 = vpack.c.b16 %v1845, %v1841
    %v1958 = vpack.c.b16 %v1846, %v1842
    %v1959 = vpack.c.b16 %v1847, %v1843
    %v1960 = vpack.c.b16 %v1848, %v1844
    %v1961 = vpack.c.b16 %v1853, %v1849
    %v1962 = vpack.c.b16 %v1854, %v1850
    %v1963 = vpack.c.b16 %v1855, %v1851
    %v1964 = vpack.c.b16 %v1856, %v1852
    %v1965 = vpack.c.b16 %v1861, %v1857
    %v1966 = vpack.c.b16 %v1862, %v1858
    %v1967 = vpack.c.b16 %v1863, %v1859
    %v1968 = vpack.c.b16 %v1864, %v1860
    %v1969 = vpack.c.b16 %v1869, %v1865
    %v1970 = vpack.c.b16 %v1870, %v1866
    %v1971 = vpack.c.b16 %v1871, %v1867
    %v1972 = vpack.c.b16 %v1872, %v1868
    %v1973 = vpack.c.b16 %v1877, %v1873
    %v1974 = vpack.c.b16 %v1878, %v1874
    %v1975 = vpack.c.b16 %v1879, %v1875
    %v1976 = vpack.c.b16 %v1880, %v1876
    %2073 = vmatprep.subr.bf16.mxu0 %v1910
    %2074 = vmatpush1.bf16.msra.mxu0 %v1909
    %2075 = vmatprep.subr.bf16.mxu0 %v1906
    %2076 = vmatpush1.bf16.msra.mxu0 %v1905
    %2077 = vmatprep.subr.bf16.mxu0 %v1902
    %2078 = vmatpush1.bf16.msra.mxu0 %v1901
    %2079 = vmatprep.subr.bf16.mxu0 %v1898
    %2080 = vmatpush1.bf16.msra.mxu0 %v1897
    %2081 = vmatprep.subr.bf16.mxu0 %v1894
    %2082 = vmatpush1.bf16.msra.mxu0 %v1893
    %2083 = vmatprep.subr.bf16.mxu0 %v1890
    %2084 = vmatpush1.bf16.msra.mxu0 %v1889
    %2085 = vmatprep.subr.bf16.mxu0 %v1886
    %2086 = vmatpush1.bf16.msra.mxu0 %v1885
    %2087 = vmatprep.subr.bf16.mxu0 %v1882
    %2088 = vmatpush1.bf16.msra.mxu0 %v1881
    %2089 = vmatprep.subr.bf16.mxu0 %v1942
    %2090 = vmatpush2.bf16.msra.mxu0 %v1941
    %2091 = vmatprep.subr.bf16.mxu0 %v1938
    %2092 = vmatpush2.bf16.msra.mxu0 %v1937
    %2093 = vmatprep.subr.bf16.mxu0 %v1934
    %2094 = vmatpush2.bf16.msra.mxu0 %v1933
    %2095 = vmatprep.subr.bf16.mxu0 %v1930
    %2096 = vmatpush2.bf16.msra.mxu0 %v1929
    %2097 = vmatprep.subr.bf16.mxu0 %v1926
    %2098 = vmatpush2.bf16.msra.mxu0 %v1925
    %2099 = vmatprep.subr.bf16.mxu0 %v1922
    %2100 = vmatpush2.bf16.msra.mxu0 %v1921
    %2101 = vmatprep.subr.bf16.mxu0 %v1918
    %2102 = vmatpush2.bf16.msra.mxu0 %v1917
    %2103 = vmatprep.subr.bf16.mxu0 %v1914
    %2104 = vmatpush2.bf16.msra.mxu0 %v1913
    %2105 = vmatprep.mubr.bf16.mxu0 %v1495
    %2106 = vmatmul.mubr.bf16.gmra.mxu0 %v1494
    %v2107 = vpop.f32.mrf.mxu0
    %v2108 = vadd.f32 0.0, %v2107
    %v2109 = vpop.f32.mrf.mxu0
    %v2110 = vadd.f32 0.0, %v2109
    %v2111 = vpop.f32.mrf.mxu0
    %v2112 = vpop.f32.mrf.mxu0
    %2113 = vdwg.mxu0
    %2114 = vmatprep.subr.bf16.mxu0 %v1974
    %2115 = vmatpush1.bf16.msra.mxu0 %v1973
    %2116 = vmatprep.subr.bf16.mxu0 %v1970
    %2117 = vmatpush1.bf16.msra.mxu0 %v1969
    %2118 = vmatprep.subr.bf16.mxu0 %v1966
    %2119 = vmatpush1.bf16.msra.mxu0 %v1965
    %2120 = vmatprep.subr.bf16.mxu0 %v1962
    %2121 = vmatpush1.bf16.msra.mxu0 %v1961
    %2122 = vmatprep.subr.bf16.mxu0 %v1958
    %2123 = vmatpush1.bf16.msra.mxu0 %v1957
    %2124 = vmatprep.subr.bf16.mxu0 %v1954
    %2125 = vmatpush1.bf16.msra.mxu0 %v1953
    %2126 = vmatprep.subr.bf16.mxu0 %v1950
    %2127 = vmatpush1.bf16.msra.mxu0 %v1949
    %2128 = vmatprep.subr.bf16.mxu0 %v1946
    %2129 = vmatpush1.bf16.msra.mxu0 %v1945
    %2130 = vmatprep.subr.bf16.mxu0 0
    %2131 = vmatpush2.bf16.msra.mxu0 0
    %2132 = vmatprep.subr.bf16.mxu0 0
    %2133 = vmatpush2.bf16.msra.mxu0 0
    %2134 = vmatprep.subr.bf16.mxu0 0
    %2135 = vmatpush2.bf16.msra.mxu0 0
    %2136 = vmatprep.subr.bf16.mxu0 0
    %2137 = vmatpush2.bf16.msra.mxu0 0
    %2138 = vmatprep.subr.bf16.mxu0 0
    %2139 = vmatpush2.bf16.msra.mxu0 0
    %2140 = vmatprep.subr.bf16.mxu0 0
    %2141 = vmatpush2.bf16.msra.mxu0 0
    %2142 = vmatprep.subr.bf16.mxu0 0
    %2143 = vmatpush2.bf16.msra.mxu0 0
    %2144 = vmatprep.subr.bf16.mxu0 0
    %2145 = vmatpush2.bf16.msra.mxu0 0
    %2146 = vmatprep.mubr.bf16.mxu0 0
    %2147 = vmatmul.mubr.bf16.gmra.mxu0 %v1496
    %v2148 = vpop.f32.mrf.mxu0
    %v2149 = vadd.f32 %v2108, %v2148
    %v2150 = vpop.f32.mrf.mxu0
    %v2151 = vadd.f32 %v2110, %v2150
    %v2152 = vpop.f32.mrf.mxu0
    %v2153 = vpop.f32.mrf.mxu0
    %2154 = vdwg.mxu0
    %2155 = vmatprep.subr.bf16.mxu0 %v1912
    %2156 = vmatpush1.bf16.msra.mxu0 %v1911
    %2157 = vmatprep.subr.bf16.mxu0 %v1908
    %2158 = vmatpush1.bf16.msra.mxu0 %v1907
    %2159 = vmatprep.subr.bf16.mxu0 %v1904
    %2160 = vmatpush1.bf16.msra.mxu0 %v1903
    %2161 = vmatprep.subr.bf16.mxu0 %v1900
    %2162 = vmatpush1.bf16.msra.mxu0 %v1899
    %2163 = vmatprep.subr.bf16.mxu0 %v1896
    %2164 = vmatpush1.bf16.msra.mxu0 %v1895
    %2165 = vmatprep.subr.bf16.mxu0 %v1892
    %2166 = vmatpush1.bf16.msra.mxu0 %v1891
    %2167 = vmatprep.subr.bf16.mxu0 %v1888
    %2168 = vmatpush1.bf16.msra.mxu0 %v1887
    %2169 = vmatprep.subr.bf16.mxu0 %v1884
    %2170 = vmatpush1.bf16.msra.mxu0 %v1883
    %2171 = vmatprep.subr.bf16.mxu0 %v1944
    %2172 = vmatpush2.bf16.msra.mxu0 %v1943
    %2173 = vmatprep.subr.bf16.mxu0 %v1940
    %2174 = vmatpush2.bf16.msra.mxu0 %v1939
    %2175 = vmatprep.subr.bf16.mxu0 %v1936
    %2176 = vmatpush2.bf16.msra.mxu0 %v1935
    %2177 = vmatprep.subr.bf16.mxu0 %v1932
    %2178 = vmatpush2.bf16.msra.mxu0 %v1931
    %2179 = vmatprep.subr.bf16.mxu0 %v1928
    %2180 = vmatpush2.bf16.msra.mxu0 %v1927
    %2181 = vmatprep.subr.bf16.mxu0 %v1924
    %2182 = vmatpush2.bf16.msra.mxu0 %v1923
    %2183 = vmatprep.subr.bf16.mxu0 %v1920
    %2184 = vmatpush2.bf16.msra.mxu0 %v1919
    %2185 = vmatprep.subr.bf16.mxu0 %v1916
    %2186 = vmatpush2.bf16.msra.mxu0 %v1915
    %2187 = vmatprep.mubr.bf16.mxu0 %v1495
    %2188 = vmatmul.mubr.bf16.gmra.mxu0 %v1494
    %v2189 = vpop.f32.mrf.mxu0
    %v2190 = vadd.f32 0.0, %v2189
    %v2191 = vpop.f32.mrf.mxu0
    %v2192 = vadd.f32 0.0, %v2191
    %v2193 = vpop.f32.mrf.mxu0
    %v2194 = vpop.f32.mrf.mxu0
    %2195 = vdwg.mxu0
    %2196 = vmatprep.subr.bf16.mxu0 %v1976
    %2197 = vmatpush1.bf16.msra.mxu0 %v1975
    %2198 = vmatprep.subr.bf16.mxu0 %v1972
    %2199 = vmatpush1.bf16.msra.mxu0 %v1971
    %2200 = vmatprep.subr.bf16.mxu0 %v1968
    %2201 = vmatpush1.bf16.msra.mxu0 %v1967
    %2202 = vmatprep.subr.bf16.mxu0 %v1964
    %2203 = vmatpush1.bf16.msra.mxu0 %v1963
    %2204 = vmatprep.subr.bf16.mxu0 %v1960
    %2205 = vmatpush1.bf16.msra.mxu0 %v1959
    %2206 = vmatprep.subr.bf16.mxu0 %v1956
    %2207 = vmatpush1.bf16.msra.mxu0 %v1955
    %2208 = vmatprep.subr.bf16.mxu0 %v1952
    %2209 = vmatpush1.bf16.msra.mxu0 %v1951
    %2210 = vmatprep.subr.bf16.mxu0 %v1948
    %2211 = vmatpush1.bf16.msra.mxu0 %v1947
    %2212 = vmatprep.subr.bf16.mxu0 0
    %2213 = vmatpush2.bf16.msra.mxu0 0
    %2214 = vmatprep.subr.bf16.mxu0 0
    %2215 = vmatpush2.bf16.msra.mxu0 0
    %2216 = vmatprep.subr.bf16.mxu0 0
    %2217 = vmatpush2.bf16.msra.mxu0 0
    %2218 = vmatprep.subr.bf16.mxu0 0
    %2219 = vmatpush2.bf16.msra.mxu0 0
    %2220 = vmatprep.subr.bf16.mxu0 0
    %2221 = vmatpush2.bf16.msra.mxu0 0
    %2222 = vmatprep.subr.bf16.mxu0 0
    %2223 = vmatpush2.bf16.msra.mxu0 0
    %2224 = vmatprep.subr.bf16.mxu0 0
    %2225 = vmatpush2.bf16.msra.mxu0 0
    %2226 = vmatprep.subr.bf16.mxu0 0
    %2227 = vmatpush2.bf16.msra.mxu0 0
    %2228 = vmatprep.mubr.bf16.mxu0 0
    %2229 = vmatmul.mubr.bf16.gmra.mxu0 %v1496
    %v2230 = vpop.f32.mrf.mxu0
    %v2231 = vadd.f32 %v2190, %v2230
    %v2232 = vpop.f32.mrf.mxu0
    %v2233 = vadd.f32 %v2192, %v2232
    %v2234 = vpop.f32.mrf.mxu0
    %v2235 = vpop.f32.mrf.mxu0
    %2236 = vdwg.mxu0
    %v2237 = vmax.f32 %v2149, %v2151
    %v2238 = vmax.f32 %v2231, %v2233
    %v2239 = vmax.f32 %v2237, %v2238
    %v2240 = vld [vmem:[%s4] sm:$0x1]
    %v2242 = vlaneseq
    %v2243 = vshrl.u32 %v2242, 7
    %v2244 = vsub.s32 0, %v2243
    %v2245 = vrot.slane %v2240, %v2244
    %v2247 = vadd.f32 %v2239, %v2245
    %v2248 = vmax.f32 %v2247, 0.0
    %vm2249 = vcmask 155648
    %2250 = vst.msk [vmem:[#allocation2] sm:$0x1] %vm2249, %v2248
    %2252 = vrot.lane.b32.xlu0 %v2248, 20
    %v2253 = vpop.permute.xlu0 %2252
    %vm2255 = vcmask 320673
    %2256 = vst.msk [vmem:[#allocation2 - $0x1] sm:$0x2] %vm2255, %v2253
    %2257 = vrot.lane.b32.xlu0 %v2248, 40
    %v2258 = vpop.permute.xlu0 %2257
    %vm2260 = vcmask 403778
    %2261 = vst.msk [vmem:[#allocation2 - $0x2] sm:$0x4] %vm2260, %v2258
    %2262 = vrot.lane.b32.xlu0 %v2248, 118
    %v2263 = vpop.permute.xlu0 %2262
    %vm2265 = vcmask 75778
    %2266 = vst.msk [vmem:[#allocation2 - $0x1] sm:$0x4] %vm2265, %v2263
    %2267 = vrot.lane.b32.xlu0 %v2248, 10
    %v2268 = vpop.permute.xlu0 %2267
    %vm2270 = vcmask 240723
    %2271 = vst.msk [vmem:[#allocation2 - $0x2] sm:$0x8] %vm2270, %v2268
    %2272 = vrot.lane.b32.xlu0 %v2248, 30
    %v2273 = vpop.permute.xlu0 %2272
    %vm2275 = vcmask 405748
    %2276 = vst.msk [vmem:[#allocation2 - $0x3] sm:$0x10] %vm2275, %v2273
    %v2277 = vld [vmem:[#allocation2] sm:$0x3]
    %v2278 = vld [vmem:[%s5] sm:$0xff]
    %v2279 = vld [vmem:[%s5 + $0x8] sm:$0xff]
    %v2280 = vld [vmem:[%s5 + $0x10] sm:$0xff]
    %v2281 = vld [vmem:[%s5 + $0x18] sm:$0xff]
    %v2282 = vld [vmem:[%s5 + $0x20] sm:$0xff]
    %v2283 = vld [vmem:[%s5 + $0x28] sm:$0xff]
    %v2284 = vld [vmem:[%s5 + $0x30] sm:$0x3]
    %v2285 = vld [vmem:[%s6] sm:$0x1]
    %v2287 = vlaneseq
    %v2288 = vshrl.u32 %v2287, 7
    %v2289 = vsub.s32 0, %v2288
    %v2290 = vrot.slane %v2285, %v2289
    %vm2292 = vcmask 408576
    %v2294 = vsel %vm2292, %v2277, 0
    %vm2296 = vcmask 1041408
    %v2298 = vsel %vm2296, %v2284, 0
    %2300 = vmatprep.subr.mxu0 0.0
    %2301 = vmatpush1.msra.mxu0 0.0
    %2302 = vmatprep.subr.mxu0 0.0
    %2303 = vmatpush1.msra.mxu0 0.0
    %2304 = vmatprep.subr.mxu0 0.0
    %2305 = vmatpush1.msra.mxu0 0.0
    %2306 = vmatprep.subr.mxu0 0.0
    %2307 = vmatpush1.msra.mxu0 0.0
    %2308 = vmatprep.subr.mxu0 0.0
    %2309 = vmatpush1.msra.mxu0 0.0
    %2310 = vmatprep.subr.mxu0 0.0
    %2311 = vmatpush1.msra.mxu0 0.0
    %2312 = vmatprep.subr.mxu0 0.0
    %2313 = vmatpush1.msra.mxu0 0.0
    %2314 = vmatprep.subr.mxu0 0.0
    %2315 = vmatpush1.msra.mxu0 0.0
    %2316 = vmatprep.subr.mxu0 0.0
    %2317 = vmatpush1.msra.mxu0 0.0
    %2318 = vmatprep.subr.mxu0 0.0
    %2319 = vmatpush1.msra.mxu0 %v2298
    %2320 = vmatprep.subr.mxu0 0.0
    %2321 = vmatpush1.msra.mxu0 %v2283
    %2322 = vmatprep.subr.mxu0 0.0
    %2323 = vmatpush1.msra.mxu0 %v2282
    %2324 = vmatprep.subr.mxu0 0.0
    %2325 = vmatpush1.msra.mxu0 %v2281
    %2326 = vmatprep.subr.mxu0 0.0
    %2327 = vmatpush1.msra.mxu0 %v2280
    %2328 = vmatprep.subr.mxu0 0.0
    %2329 = vmatpush1.msra.mxu0 %v2279
    %2330 = vmatprep.subr.mxu0 0.0
    %2331 = vmatpush1.msra.mxu0 %v2278
    %2332 = vmatprep.subr.mxu0 0.0
    %2333 = vmatpush2.msra.mxu0 0.0
    %2334 = vmatprep.subr.mxu0 0.0
    %2335 = vmatpush2.msra.mxu0 0.0
    %2336 = vmatprep.subr.mxu0 0.0
    %2337 = vmatpush2.msra.mxu0 0.0
    %2338 = vmatprep.subr.mxu0 0.0
    %2339 = vmatpush2.msra.mxu0 0.0
    %2340 = vmatprep.subr.mxu0 0.0
    %2341 = vmatpush2.msra.mxu0 0.0
    %2342 = vmatprep.subr.mxu0 0.0
    %2343 = vmatpush2.msra.mxu0 0.0
    %2344 = vmatprep.subr.mxu0 0.0
    %2345 = vmatpush2.msra.mxu0 0.0
    %2346 = vmatprep.subr.mxu0 0.0
    %2347 = vmatpush2.msra.mxu0 0.0
    %2348 = vmatprep.subr.mxu0 0.0
    %2349 = vmatpush2.msra.mxu0 0.0
    %2350 = vmatprep.subr.mxu0 0.0
    %2351 = vmatpush2.msra.mxu0 0.0
    %2352 = vmatprep.subr.mxu0 0.0
    %2353 = vmatpush2.msra.mxu0 0.0
    %2354 = vmatprep.subr.mxu0 0.0
    %2355 = vmatpush2.msra.mxu0 0.0
    %2356 = vmatprep.subr.mxu0 0.0
    %2357 = vmatpush2.msra.mxu0 0.0
    %2358 = vmatprep.subr.mxu0 0.0
    %2359 = vmatpush2.msra.mxu0 0.0
    %2360 = vmatprep.subr.mxu0 0.0
    %2361 = vmatpush2.msra.mxu0 0.0
    %2362 = vmatprep.subr.mxu0 0.0
    %2363 = vmatpush2.msra.mxu0 0.0
    %2364 = vmatprep.mubr.f32.mxu0 0.0
    %2365 = vmatmul.mubr.f32.gmra.mxu0 %v2294
    %v2366 = vpop.f32.mrf.mxu0
    %v2367 = vadd.f32 %v2290, %v2366
    %v2368 = vpop.f32.mrf.mxu0
    %2369 = vdwg.mxu0
    %vm2370 = vcmask 74752
    %v2371 = vsel %vm2370, %v2367, -inf
    %2372 = vmax.xlane.f32.xlu0 %v2371
    %v2373 = vpop.xlane.xlu0 %2372
    %v2374 = vsub.f32 %v2367, %v2373
    %v2375 = vmul.f32 %v2374, 1.442695
    %v2376 = vpow.pop %v2375
    %v2377 = vsel %vm2370, %v2376, 0.0
    %2378 = vadd.xlane.f32.xlu0 %v2377
    %v2379 = vpop.xlane.xlu0 %2378
    %v2380 = vlog2.pop %v2379
    %v2381 = vmul.f32 %v2380, 0.6931472
    %v2382 = vsub.f32 %v2374, %v2381
    %2383 = vst.msk [vmem:[#allocation8] sm:$0x3] %vm2370, %v2382
    // Predicated region
    $region38: #{tpu_custom_call.1} parent=1 // pred_check
      _
    $region39: #{tpu_custom_call.1} parent=1 // pred_check_branch
      %2385 = sbr.rel (0) target = $region41
    $region40: #{tpu_custom_call.1} parent=1 // pred_region
      %s2387 = ssub.s32 32, 32
      %2388 = vsyncadd [#allocation5], %s2387
      %s2390 = sshll.u32 [#allocation8], 4
      %s2391 = int_to_ptr.vmem [resolvable:$true] %s2390
      %2393 = dma.vmem_to_hbm [thread:$0]  %s2391, 32, %s7, [#allocation5]
    $region41: #{tpu_custom_call.1} parent=1 // pred_fallthru
      _
    // Predicated region
    $region42: #{tpu_custom_call.1} parent=1 // pred_check
      _
    $region43: #{tpu_custom_call.1} parent=1 // pred_check_branch
      %2395 = sbr.rel (0) target = $region45
    $region44: #{tpu_custom_call.1} parent=1 // pred_region
      %2396 = dma.done [#allocation5], 32
    $region45: #{tpu_custom_call.1} parent=1 // pred_fallthru
      _
    %2397 = vsyncpa [#allocation4], 1
    %2398 = vsyncpa [#allocation7], 1
    %2399 = vsyncpa [#allocation5], 1

</llo_original>
